<compile_context>
chip_gen: v7x
topology: tpu7x:2x2x1
jax: 0.10.0
libtpu: 0.0.40
codegen_flags: <defaults>
</compile_context>

<pallas_src>
import functools
import math

import jax
import jax.numpy as jnp
from jax.experimental import pallas as pl
from jax.experimental.pallas import tpu as pltpu


_LANE = 128      # last block dim: multiple of the 128-lane width
_SUBLANE = 16    # row tiles: multiple of 16 (bf16 sublane packing)
_SQRT_2_OVER_PI = math.sqrt(2.0 / math.pi)


def _round_up(x, m):
    return ((x + m - 1) // m) * m


def _cdiv(a, b):
    return (a + b - 1) // b


def _gelu(x):
    # tanh-approximate GELU: the polynomial stays on the VPU but tanh goes to
    # the EUP slot (co-issues with MXU), keeping the inter-matmul path short.
    return 0.5 * x * (1.0 + jnp.tanh(_SQRT_2_OVER_PI * (x + 0.044715 * x * x * x)))


def _vmem_capacity_bytes():
    try:
        return int(pltpu.get_tpu_info().vmem_capacity_bytes)
    except Exception:
        return 64 * 1024 * 1024  # conservative fallback (v7x per-TensorCore)


# --------------------------------------------------------------------------- #
# Kernels
# --------------------------------------------------------------------------- #
def ffn_kernel_resident(x_ref, w1_ref, b1_ref, w2_ref, b2_ref, o_ref):
    # x_ref:(TM,word_p) bf16 | w1:(word_p,hid_p) bf16 resident | b1:(1,hid_p)
    # w2:(hid_p,out_p) bf16 resident | b2:(1,out_p) | o:(TM,out_p)
    h = jnp.dot(x_ref[...], w1_ref[...], preferred_element_type=jnp.float32)
    h = _gelu(h + b1_ref[...].astype(jnp.float32))
    y = jnp.dot(h.astype(jnp.bfloat16), w2_ref[...],
                preferred_element_type=jnp.float32)
    o_ref[...] = (y + b2_ref[...].astype(jnp.float32)).astype(o_ref.dtype)


def ffn_kernel_hidden_tiled(x_ref, w1_ref, b1_ref, w2_ref, b2_ref, o_ref, acc_ref):
    # grid = (m_tiles, hidden_tiles); hidden axis is "arbitrary" (reduction).
    hk = pl.program_id(1)

    @pl.when(hk == 0)
    def _():
        acc_ref[...] = jnp.zeros_like(acc_ref)

    h = jnp.dot(x_ref[...], w1_ref[...], preferred_element_type=jnp.float32)
    h = _gelu(h + b1_ref[...].astype(jnp.float32))
    acc_ref[...] += jnp.dot(h.astype(jnp.bfloat16), w2_ref[...],
                            preferred_element_type=jnp.float32)

    @pl.when(hk == pl.num_programs(1) - 1)
    def _():
        o_ref[...] = (acc_ref[...] + b2_ref[...].astype(jnp.float32)).astype(o_ref.dtype)


# --------------------------------------------------------------------------- #
# Param preparation (ONE-TIME, outside the per-call path)
# --------------------------------------------------------------------------- #
def prepare_ffn_params(w1, b1, w2, b2, param_dtype=jnp.bfloat16):
    """Pad feature dims to multiples of 128 and cast to bf16 once.

    Weights are [in, out] (transposed relative to nn.Linear's [out, in]).
    Zero padding is exact: zero weight rows/cols contribute 0, padded hidden
    units get bias 0 -> gelu(0)=0, padded output columns are sliced off later.
    """
    word_dim, hidden_dim = w1.shape
    out_dim = w2.shape[1]
    word_p = _round_up(word_dim, _LANE)
    hidden_p = _round_up(hidden_dim, _LANE)
    out_p = _round_up(out_dim, _LANE)

    b1 = b1.reshape(1, hidden_dim)
    b2 = b2.reshape(1, out_dim)
    w1 = jnp.pad(w1, ((0, word_p - word_dim), (0, hidden_p - hidden_dim)))
    b1 = jnp.pad(b1, ((0, 0), (0, hidden_p - hidden_dim)))
    w2 = jnp.pad(w2, ((0, hidden_p - hidden_dim), (0, out_p - out_dim)))
    b2 = jnp.pad(b2, ((0, 0), (0, out_p - out_dim)))
    return (w1.astype(param_dtype), b1.astype(param_dtype),
            w2.astype(param_dtype), b2.astype(param_dtype))


# --------------------------------------------------------------------------- #
# Forward wrapper
# --------------------------------------------------------------------------- #
@functools.partial(jax.jit, static_argnames=("out_dim", "tile_m"))
def ffn_forward(x, w1p, b1p, w2p, b2p, *, out_dim, tile_m=None):
    """x: [..., word_dim] -> [..., out_dim].  Dropout = identity (eval mode).

    w1p/b1p/w2p/b2p must come from prepare_ffn_params (padded, bf16).
    """
    word_dim = x.shape[-1]
    word_p, hidden_p = w1p.shape
    out_p = w2p.shape[1]
    out_dtype = x.dtype

    lead = x.shape[:-1]
    m = math.prod(lead) if lead else 1
    x2 = x.reshape(m, word_dim)
    if word_p != word_dim:
        x2 = jnp.pad(x2, ((0, 0), (0, word_p - word_dim)))
    x2 = x2.astype(jnp.bfloat16)   # halve streamed input bytes; MXU operand dtype

    # ---- generation-aware budgets -------------------------------------------------
    vmem_cap = _vmem_capacity_bytes()
    vmem_budget = int(0.8 * vmem_cap)
    small_vmem = vmem_cap <= 80 * 1024 * 1024   # v7x-like: 64 MiB/TC, 2 TCs share grid

    # ---- row tiling (M is never padded; the ragged last tile's stores are masked)
    if tile_m is None:
        tile_m = 256 if small_vmem else 512
    tm = min(tile_m, _round_up(m, _SUBLANE))
    if small_vmem and m >= 2 * _SUBLANE:
        # keep >= 2 grid steps so both TensorCores get work (axis 0 is "parallel")
        tm = min(tm, _round_up(_cdiv(m, 2), _SUBLANE))
    tm = max(_SUBLANE, _round_up(tm, _SUBLANE))

    # ---- hidden tiling: resident bf16 weights if they fit, else stream hidden blocks
    xsz = 2                                   # bf16 activations
    osz = jnp.dtype(out_dtype).itemsize

    def footprint(th):
        wbytes = 2 * ((word_p * th + th * out_p) * 2 + (th + out_p) * 2)  # 2 bufs each
        io = 2 * tm * word_p * xsz + 2 * tm * out_p * osz                 # dbl-buffered
        inter = tm * th * 4 + tm * out_p * 4                              # f32 h + acc
        return wbytes + io + inter

    th = hidden_p
    if footprint(th) > vmem_budget:
        # largest divisor tile of hidden_p (multiple of 128) that fits the budget
        q = hidden_p // _LANE
        best = _LANE
        for d in range(1, q + 1):
            if q % d == 0:
                cand = d * _LANE
                if cand > best and footprint(cand) <= vmem_budget:
                    best = cand
        th = best
    n_hk = hidden_p // th

    need = footprint(th)
    vmem_limit = int(min(max(int(1.25 * need), 32 * 1024 * 1024), vmem_budget))

    n_m = _cdiv(m, tm)
    flops = 2.0 * m * (word_p * hidden_p + hidden_p * out_p)
    weight_bytes = (word_p * hidden_p + hidden_p * out_p) * 2
    weight_passes = 1 if n_hk == 1 else n_m
    bytes_accessed = m * word_p * xsz + m * out_p * osz + weight_passes * weight_bytes
    cost = pl.CostEstimate(flops=int(flops),
                           transcendentals=int(m * hidden_p),
                           bytes_accessed=int(bytes_accessed))

    if n_hk == 1:
        grid = (n_m,)
        in_specs = [
            pl.BlockSpec((tm, word_p), lambda i: (i, 0)),
            # constant index maps -> weights DMA'd once, revisited each step
            pl.BlockSpec((word_p, hidden_p), lambda i: (0, 0)),
            pl.BlockSpec((1, hidden_p), lambda i: (0, 0)),
            pl.BlockSpec((hidden_p, out_p), lambda i: (0, 0)),
            pl.BlockSpec((1, out_p), lambda i: (0, 0)),
        ]
        out_specs = pl.BlockSpec((tm, out_p), lambda i: (i, 0))
        kernel = ffn_kernel_resident
        scratch = []
        dims = ("parallel",)
    else:
        grid = (n_m, n_hk)
        in_specs = [
            pl.BlockSpec((tm, word_p), lambda i, k: (i, 0)),
            pl.BlockSpec((word_p, th), lambda i, k: (0, k)),
            pl.BlockSpec((1, th), lambda i, k: (0, k)),
            pl.BlockSpec((th, out_p), lambda i, k: (k, 0)),
            pl.BlockSpec((1, out_p), lambda i, k: (0, 0)),
        ]
        out_specs = pl.BlockSpec((tm, out_p), lambda i, k: (i, 0))
        kernel = ffn_kernel_hidden_tiled
        scratch = [pltpu.VMEM((tm, out_p), jnp.float32)]
        dims = ("parallel", "arbitrary")

    out = pl.pallas_call(
        kernel,
        out_shape=jax.ShapeDtypeStruct((m, out_p), out_dtype),
        grid_spec=pltpu.PrefetchScalarGridSpec(
            num_scalar_prefetch=0,
            grid=grid,
            in_specs=in_specs,
            out_specs=out_specs,
            scratch_shapes=scratch,
        ),
        compiler_params=pltpu.CompilerParams(
            dimension_semantics=dims,
            vmem_limit_bytes=vmem_limit,
        ),
        cost_estimate=cost,
    )(x2, w1p, b1p, w2p, b2p)

    if out_p != out_dim:
        # TODO(synk): profile lane-dense store + slice vs masked stores at out_dim.
        out = out[:, :out_dim]
    return out.reshape(*lead, out_dim)


def init_ffn_params(key, word_dim, hidden_dim, out_dim, dtype=jnp.float32):
    """Deterministic synthetic params. Weights stored as [in, out]."""
    k1, k2, k3, k4 = jax.random.split(key, 4)
    lim1 = 1.0 / math.sqrt(word_dim)
    lim2 = 1.0 / math.sqrt(hidden_dim)
    w1 = jax.random.uniform(k1, (word_dim, hidden_dim), dtype, -lim1, lim1)
    b1 = jax.random.uniform(k2, (1, hidden_dim), dtype, -lim1, lim1)
    w2 = jax.random.uniform(k3, (hidden_dim, out_dim), dtype, -lim2, lim2)
    b2 = jax.random.uniform(k4, (1, out_dim), dtype, -lim2, lim2)
    return w1, b1, w2, b2


if __name__ == "__main__":
    # [B, S, word_dim] token features; M = B*S = 512.
    B, S = 4, 128
    word_dim, hidden_dim, out_dim = 128, 256, 128

    key = jax.random.PRNGKey(0)
    kx, kp = jax.random.split(key)
    x = jax.random.normal(kx, (B, S, word_dim), jnp.float32)
    w1, b1, w2, b2 = init_ffn_params(kp, word_dim, hidden_dim, out_dim)

    # one-time param prep (pad + bf16 cast) outside the per-call path
    w1p, b1p, w2p, b2p = prepare_ffn_params(w1, b1, w2, b2)

    out = jax.block_until_ready(
        ffn_forward(x, w1p, b1p, w2p, b2p, out_dim=out_dim))

    # reference: same math (bf16 MXU operands, f32 accumulation, tanh-GELU)
    xb = x.reshape(-1, word_dim).astype(jnp.bfloat16)
    h = jnp.dot(xb, w1.astype(jnp.bfloat16), preferred_element_type=jnp.float32) + b1
    h = 0.5 * h * (1.0 + jnp.tanh(_SQRT_2_OVER_PI * (h + 0.044715 * h * h * h)))
    ref = jnp.dot(h.astype(jnp.bfloat16), w2.astype(jnp.bfloat16),
                  preferred_element_type=jnp.float32) + b2
    ref = ref.reshape(B, S, out_dim).astype(x.dtype)

    assert out.shape == (B, S, out_dim), out.shape
    assert jnp.allclose(out, ref, atol=2e-2, rtol=2e-2), "mismatch vs reference"

    print("KERNEL_OK")
</pallas_src>

<mosaic_0001>
module attributes {stable_mosaic.version = 11 : i64} {
  func.func @ffn_kernel_resident(%arg0: i32, %arg1: memref<256x128xbf16, #tpu.memory_space<vmem>>, %arg2: memref<128x256xbf16, #tpu.memory_space<vmem>>, %arg3: memref<1x256xbf16, #tpu.memory_space<vmem>>, %arg4: memref<256x128xbf16, #tpu.memory_space<vmem>>, %arg5: memref<1x128xbf16, #tpu.memory_space<vmem>>, %arg6: memref<256x128xf32, #tpu.memory_space<vmem>>) attributes {dimension_semantics = [#tpu.dimension_semantics<parallel>], iteration_bounds = array<i64: 2>, scalar_prefetch = 0 : i64, scratch_operands = 0 : i64, tpu.core_type = #tpu.core_type<tc>, window_params = [{transform_indices = @transform_0, window_bounds = array<i64: 256, 128>}, {pipeline_mode = #tpu.pipeline_mode<synchronous>, transform_indices = @transform_1, window_bounds = array<i64: 128, 256>}, {pipeline_mode = #tpu.pipeline_mode<synchronous>, transform_indices = @transform_2, window_bounds = array<i64: 1, 256>}, {pipeline_mode = #tpu.pipeline_mode<synchronous>, transform_indices = @transform_3, window_bounds = array<i64: 256, 128>}, {pipeline_mode = #tpu.pipeline_mode<synchronous>, transform_indices = @transform_4, window_bounds = array<i64: 1, 128>}, {transform_indices = @transform_5, window_bounds = array<i64: 256, 128>}]} {
    %c0 = arith.constant 0 : index
    %c0_0 = arith.constant 0 : index
    %0 = vector.load %arg1[%c0, %c0_0] : memref<256x128xbf16, #tpu.memory_space<vmem>>, vector<256x128xbf16>
    %c0_1 = arith.constant 0 : index
    %c0_2 = arith.constant 0 : index
    %1 = vector.load %arg2[%c0_1, %c0_2] : memref<128x256xbf16, #tpu.memory_space<vmem>>, vector<128x256xbf16>
    %cst = arith.constant dense<0.000000e+00> : vector<256x256xf32>
    %2 = tpu.matmul %0, %1, %cst {dimension_numbers = #tpu.dot_dimension_numbers<[1], [0], [0], [1], [0, 0, 1, 1], [], []>} : vector<256x128xbf16>, vector<128x256xbf16>, vector<256x256xf32> -> vector<256x256xf32>
    %c0_3 = arith.constant 0 : index
    %c0_4 = arith.constant 0 : index
    %3 = vector.load %arg3[%c0_3, %c0_4] : memref<1x256xbf16, #tpu.memory_space<vmem>>, vector<1x256xbf16>
    %4 = arith.extf %3 : vector<1x256xbf16> to vector<1x256xf32>
    %5 = vector.broadcast %4 : vector<1x256xf32> to vector<256x256xf32>
    %6 = arith.addf %2, %5 : vector<256x256xf32>
    %cst_5 = arith.constant 5.000000e-01 : f32
    %7 = vector.broadcast %cst_5 : f32 to vector<256x256xf32>
    %8 = arith.mulf %7, %6 : vector<256x256xf32>
    %cst_6 = arith.constant 4.471500e-02 : f32
    %9 = vector.broadcast %cst_6 : f32 to vector<256x256xf32>
    %10 = arith.mulf %9, %6 : vector<256x256xf32>
    %11 = arith.mulf %10, %6 : vector<256x256xf32>
    %12 = arith.mulf %11, %6 : vector<256x256xf32>
    %13 = arith.addf %6, %12 : vector<256x256xf32>
    %cst_7 = arith.constant 0.797884583 : f32
    %14 = vector.broadcast %cst_7 : f32 to vector<256x256xf32>
    %15 = arith.mulf %14, %13 : vector<256x256xf32>
    %16 = math.tanh %15 : vector<256x256xf32>
    %cst_8 = arith.constant 1.000000e+00 : f32
    %17 = vector.broadcast %cst_8 : f32 to vector<256x256xf32>
    %18 = arith.addf %17, %16 : vector<256x256xf32>
    %19 = arith.mulf %8, %18 : vector<256x256xf32>
    %20 = arith.truncf %19 : vector<256x256xf32> to vector<256x256xbf16>
    %c0_9 = arith.constant 0 : index
    %c0_10 = arith.constant 0 : index
    %21 = vector.load %arg4[%c0_9, %c0_10] : memref<256x128xbf16, #tpu.memory_space<vmem>>, vector<256x128xbf16>
    %cst_11 = arith.constant dense<0.000000e+00> : vector<256x128xf32>
    %22 = tpu.matmul %20, %21, %cst_11 {dimension_numbers = #tpu.dot_dimension_numbers<[1], [0], [0], [1], [0, 0, 1, 1], [], []>} : vector<256x256xbf16>, vector<256x128xbf16>, vector<256x128xf32> -> vector<256x128xf32>
    %c0_12 = arith.constant 0 : index
    %c0_13 = arith.constant 0 : index
    %23 = vector.load %arg5[%c0_12, %c0_13] : memref<1x128xbf16, #tpu.memory_space<vmem>>, vector<1x128xbf16>
    %24 = arith.extf %23 : vector<1x128xbf16> to vector<1x128xf32>
    %25 = vector.broadcast %24 : vector<1x128xf32> to vector<256x128xf32>
    %26 = arith.addf %22, %25 : vector<256x128xf32>
    %c0_14 = arith.constant 0 : index
    %c0_15 = arith.constant 0 : index
    %27 = vector.load %arg6[%c0_14, %c0_15] : memref<256x128xf32, #tpu.memory_space<vmem>>, vector<256x128xf32>
    tpu.vector_store %arg6[%c0_14, %c0_15], %26 {strides = array<i32>} : memref<256x128xf32, #tpu.memory_space<vmem>>, vector<256x128xf32>,
    return
  }
  func.func @transform_0(%arg0: i32) -> (i32, i32) {
    %c0_i32 = arith.constant 0 : i32
    %c0_i32_0 = arith.constant 0 : i32
    return %arg0, %c0_i32 : i32, i32
  }
  func.func @transform_1(%arg0: i32) -> (i32, i32) {
    %c0_i32 = arith.constant 0 : i32
    %c0_i32_0 = arith.constant 0 : i32
    %c0_i32_1 = arith.constant 0 : i32
    return %c0_i32, %c0_i32_0 : i32, i32
  }
  func.func @transform_2(%arg0: i32) -> (i32, i32) {
    %c0_i32 = arith.constant 0 : i32
    %c0_i32_0 = arith.constant 0 : i32
    %c0_i32_1 = arith.constant 0 : i32
    return %c0_i32, %c0_i32_0 : i32, i32
  }
  func.func @transform_3(%arg0: i32) -> (i32, i32) {
    %c0_i32 = arith.constant 0 : i32
    %c0_i32_0 = arith.constant 0 : i32
    %c0_i32_1 = arith.constant 0 : i32
    return %c0_i32, %c0_i32_0 : i32, i32
  }
  func.func @transform_4(%arg0: i32) -> (i32, i32) {
    %c0_i32 = arith.constant 0 : i32
    %c0_i32_0 = arith.constant 0 : i32
    %c0_i32_1 = arith.constant 0 : i32
    return %c0_i32, %c0_i32_0 : i32, i32
  }
  func.func @transform_5(%arg0: i32) -> (i32, i32) {
    %c0_i32 = arith.constant 0 : i32
    %c0_i32_0 = arith.constant 0 : i32
    return %arg0, %c0_i32 : i32, i32
  }
}

</mosaic_0001>

<llo_original>
// kernel: ffn_forward.1
$region0: #{ffn_forward.1}
  #allocation0 [shape = 'u32[]', space=smem, size = 0x4, offset = 0x4, fixed_abs, tag = 'smem constant byte address 0x4 - core index']
  #allocation1 [shape = 'u32[144,128]{1,0:T(1,128)}', space=vmem, size = 0x12000, scoped, tag = 'internal scratch']
  %s0 = inlined_call_operand.vmem [shape: bf16[512,128], index: 0, kind: input, shape index: {}]
  %s1 = inlined_call_operand.vmem [shape: bf16[128,256], index: 1, kind: input, shape index: {}]
  %s2 = inlined_call_operand.vmem [shape: bf16[1,256], index: 2, kind: input, shape index: {}]
  %s3 = inlined_call_operand.vmem [shape: bf16[256,128], index: 3, kind: input, shape index: {}]
  %s4 = inlined_call_operand.vmem [shape: bf16[1,128], index: 4, kind: input, shape index: {}]
  %s5 = inlined_call_operand.hbm [shape: f32[512,128], index: 5, kind: output, shape index: {}]
  %s6 = sld [smem:[#allocation0]]
  $region53: #{ffn_forward.1} parent=0
    _
  %s8 = ssub.s32 1, %s6
  %s9 = scalar_select 0, %s8, %s6
  $region1: #{ffn_forward.1} parent=0
    #allocation2 [shape = 'u8[262144]{0}', space=vmem, size = 0x40000, scoped, tag = 'output window, operand 0']
    #allocation3 [shape = 's32[2]{0}', space=sflag, size = 0x8, scoped, tag = 'scoped memory for ffn_forward.1']
    %10 = vsyncpa [#allocation3], 0
    %s11 = scalar_lea.sflag [#allocation3], 1
    %12 = vsyncpa %s11, 0
    loop: start=0, step=1, limit=4
    $region2: #{ffn_forward.1} parent=1 // loop_pre_header
      _
    $region3: #{ffn_forward.1} parent=1 // loop_header
      %s14 = sphi 0, %s18
      %p15 = scmp.ge.s32.totalorder %s14, 4
      %s24 = sphi 0, %s26
      %s27 = sphi 0, %s24
      %s28 = sphi 0, %s27
      %s44 = sphi 0, %s28
      %s48 = sphi 0, %s48
      %s50 = sphi 0, %s48
      %s51 = sphi 0, %s50
      %s65 = sphi 0, %s51
      %s69 = sphi 0, %s69
      %s71 = sphi 0, %s69
      %s72 = sphi 0, %s71
      %s86 = sphi 0, %s72
      %s90 = sphi 0, %s90
      %s92 = sphi 0, %s90
      %s93 = sphi 0, %s92
      %s107 = sphi 0, %s93
      %s111 = sphi 0, %s111
      %s113 = sphi 0, %s111
      %s114 = sphi 0, %s113
      %s128 = sphi 0, %s114
      %s134 = sphi 0, %s136
      %s137 = sphi 0, %s134
      %s138 = sphi 0, %s137
      %s154 = sphi 0, %s138
    $region4: #{ffn_forward.1} parent=1 // loop_header_branch
      %17 = sbr.rel (%p15) target = $region8
    $region5: #{ffn_forward.1} parent=1 // loop_body
      %s19 = ssub.s32 %s14, 1
      %s20 = ssub.s32 %s14, 2
      %s21 = sadd.s32 %s14, 1
      %s22 = ssub.s32 %s14, %s21
      %p23 = scmp.eq.s32.totalorder %s22, 0
      %s25 = sadd.s32 %s24, 1
      %s26 = scalar_select %p23, %s24, %s25
      %p29 = pneg %p23
      %p30 = scmp.eq.s32.totalorder %s14, 1
      %p31 = por %p29, %p30
      %p32 = scmp.ne.s32.totalorder %s24, %s27
      %p33 = scmp.eq.s32.totalorder %s14, 0
      %p34 = por %p32, %p33
      %p35 = scmp.ne.s32.totalorder %s24, %s27
      %p36 = scmp.eq.s32.totalorder %s19, 1
      %p37 = por %p35, %p36
      %p38 = scmp.ne.s32.totalorder %s27, %s28
      %p39 = scmp.eq.s32.totalorder %s19, 0
      %p40 = por %p38, %p39
      %p41 = scmp.ne.s32.totalorder %s27, %s28
      %p42 = scmp.eq.s32.totalorder %s20, 1
      %p43 = por %p41, %p42
      %p45 = scmp.ne.s32.totalorder %s28, %s44
      %p46 = scmp.eq.s32.totalorder %s20, 0
      %p47 = por %p45, %p46
      %s49 = sadd.s32 %s48, 1
      %p52 = scmp.eq.s32.totalorder %s14, 1
      %p53 = scmp.ne.s32.totalorder %s48, %s50
      %p54 = scmp.eq.s32.totalorder %s14, 0
      %p55 = por %p53, %p54
      %p56 = scmp.ne.s32.totalorder %s48, %s50
      %p57 = scmp.eq.s32.totalorder %s19, 1
      %p58 = por %p56, %p57
      %p59 = scmp.ne.s32.totalorder %s50, %s51
      %p60 = scmp.eq.s32.totalorder %s19, 0
      %p61 = por %p59, %p60
      %p62 = scmp.ne.s32.totalorder %s50, %s51
      %p63 = scmp.eq.s32.totalorder %s20, 1
      %p64 = por %p62, %p63
      %p66 = scmp.ne.s32.totalorder %s51, %s65
      %p67 = scmp.eq.s32.totalorder %s20, 0
      %p68 = por %p66, %p67
      %s70 = sadd.s32 %s69, 1
      %p73 = scmp.eq.s32.totalorder %s14, 1
      %p74 = scmp.ne.s32.totalorder %s69, %s71
      %p75 = scmp.eq.s32.totalorder %s14, 0
      %p76 = por %p74, %p75
      %p77 = scmp.ne.s32.totalorder %s69, %s71
      %p78 = scmp.eq.s32.totalorder %s19, 1
      %p79 = por %p77, %p78
      %p80 = scmp.ne.s32.totalorder %s71, %s72
      %p81 = scmp.eq.s32.totalorder %s19, 0
      %p82 = por %p80, %p81
      %p83 = scmp.ne.s32.totalorder %s71, %s72
      %p84 = scmp.eq.s32.totalorder %s20, 1
      %p85 = por %p83, %p84
      %p87 = scmp.ne.s32.totalorder %s72, %s86
      %p88 = scmp.eq.s32.totalorder %s20, 0
      %p89 = por %p87, %p88
      %s91 = sadd.s32 %s90, 1
      %p94 = scmp.eq.s32.totalorder %s14, 1
      %p95 = scmp.ne.s32.totalorder %s90, %s92
      %p96 = scmp.eq.s32.totalorder %s14, 0
      %p97 = por %p95, %p96
      %p98 = scmp.ne.s32.totalorder %s90, %s92
      %p99 = scmp.eq.s32.totalorder %s19, 1
      %p100 = por %p98, %p99
      %p101 = scmp.ne.s32.totalorder %s92, %s93
      %p102 = scmp.eq.s32.totalorder %s19, 0
      %p103 = por %p101, %p102
      %p104 = scmp.ne.s32.totalorder %s92, %s93
      %p105 = scmp.eq.s32.totalorder %s20, 1
      %p106 = por %p104, %p105
      %p108 = scmp.ne.s32.totalorder %s93, %s107
      %p109 = scmp.eq.s32.totalorder %s20, 0
      %p110 = por %p108, %p109
      %s112 = sadd.s32 %s111, 1
      %p115 = scmp.eq.s32.totalorder %s14, 1
      %p116 = scmp.ne.s32.totalorder %s111, %s113
      %p117 = scmp.eq.s32.totalorder %s14, 0
      %p118 = por %p116, %p117
      %p119 = scmp.ne.s32.totalorder %s111, %s113
      %p120 = scmp.eq.s32.totalorder %s19, 1
      %p121 = por %p119, %p120
      %p122 = scmp.ne.s32.totalorder %s113, %s114
      %p123 = scmp.eq.s32.totalorder %s19, 0
      %p124 = por %p122, %p123
      %p125 = scmp.ne.s32.totalorder %s113, %s114
      %p126 = scmp.eq.s32.totalorder %s20, 1
      %p127 = por %p125, %p126
      %p129 = scmp.ne.s32.totalorder %s114, %s128
      %p130 = scmp.eq.s32.totalorder %s20, 0
      %p131 = por %p129, %p130
      %s132 = ssub.s32 %s14, %s21
      %p133 = scmp.eq.s32.totalorder %s132, 0
      %s135 = sadd.s32 %s134, 1
      %s136 = scalar_select %p133, %s134, %s135
      %p139 = pneg %p133
      %p140 = scmp.eq.s32.totalorder %s14, 1
      %p141 = por %p139, %p140
      %p142 = scmp.ne.s32.totalorder %s134, %s137
      %p143 = scmp.eq.s32.totalorder %s14, 0
      %p144 = por %p142, %p143
      %p145 = scmp.ne.s32.totalorder %s134, %s137
      %p146 = scmp.eq.s32.totalorder %s19, 1
      %p147 = por %p145, %p146
      %p148 = scmp.ne.s32.totalorder %s137, %s138
      %p149 = scmp.eq.s32.totalorder %s19, 0
      %p150 = por %p148, %p149
      %p151 = scmp.ne.s32.totalorder %s137, %s138
      %p152 = scmp.eq.s32.totalorder %s20, 1
      %p153 = por %p151, %p152
      %p155 = scmp.ne.s32.totalorder %s138, %s154
      %p156 = scmp.eq.s32.totalorder %s20, 0
      %p157 = por %p155, %p156
      %p158 = scmp.le.s32.totalorder 1, %s14
      %p159 = scmp.lt.s32.totalorder %s14, 3
      %p160 = pnand %p158, %p159
      %p161 = pneg %p160
      // Predicated region
      $region9: #{ffn_forward.1} parent=5 // pred_check
        _
      $region10: #{ffn_forward.1} parent=5 // pred_check_branch
        %163 = sbr.rel (%p160) target = $region12
      $region11: #{ffn_forward.1} parent=5 // pred_region
        %s164 = ssub.s32 %s14, 1
        // Predicated region
        $region13: #{ffn_forward.1} parent=11 // pred_check
          %p165 = pneg %p61
        $region14: #{ffn_forward.1} parent=11 // pred_check_branch
          %167 = sbr.rel (%p165) target = $region16
        $region15: #{ffn_forward.1} parent=11 // pred_region
          _
        $region16: #{ffn_forward.1} parent=11 // pred_fallthru
          _
        // Predicated region
        $region17: #{ffn_forward.1} parent=11 // pred_check
          %p168 = pneg %p82
        $region18: #{ffn_forward.1} parent=11 // pred_check_branch
          %170 = sbr.rel (%p168) target = $region20
        $region19: #{ffn_forward.1} parent=11 // pred_region
          _
        $region20: #{ffn_forward.1} parent=11 // pred_fallthru
          _
        // Predicated region
        $region21: #{ffn_forward.1} parent=11 // pred_check
          %p171 = pneg %p103
        $region22: #{ffn_forward.1} parent=11 // pred_check_branch
          %173 = sbr.rel (%p171) target = $region24
        $region23: #{ffn_forward.1} parent=11 // pred_region
          _
        $region24: #{ffn_forward.1} parent=11 // pred_fallthru
          _
        // Predicated region
        $region25: #{ffn_forward.1} parent=11 // pred_check
          %p174 = pneg %p124
        $region26: #{ffn_forward.1} parent=11 // pred_check_branch
          %176 = sbr.rel (%p174) target = $region28
        $region27: #{ffn_forward.1} parent=11 // pred_region
          _
        $region28: #{ffn_forward.1} parent=11 // pred_fallthru
          _
      $region12: #{ffn_forward.1} parent=5 // pred_fallthru
        _
      %p177 = scmp.lt.s32.totalorder %s14, 2
      // Predicated region
      $region29: #{ffn_forward.1} parent=5 // pred_check
        %p178 = pneg %p177
      $region30: #{ffn_forward.1} parent=5 // pred_check_branch
        %180 = sbr.rel (%p178) target = $region32
      $region31: #{ffn_forward.1} parent=5 // pred_region
        // Predicated region
        $region33: #{ffn_forward.1} parent=31 // pred_check
          %p181 = pneg %p34
        $region34: #{ffn_forward.1} parent=31 // pred_check_branch
          %183 = sbr.rel (%p181) target = $region36
        $region35: #{ffn_forward.1} parent=31 // pred_region
          %s184 = smul.u32 32, %s14
          %p185 = scmp.lt.s32.totalorder %s184, 63
          %s186 = scalar_select %p185, %s184, 63
          %s187 = smul.addr %s186, 4
          %s188 = scalar_lea.vmem %s0, %s187
          %s189 = smul.u32 32, %s14
        $region36: #{ffn_forward.1} parent=31 // pred_fallthru
          _
      $region32: #{ffn_forward.1} parent=5 // pred_fallthru
        _
      %p190 = scmp.le.s32.totalorder 1, %s14
      %p191 = scmp.lt.s32.totalorder %s14, 3
      %p192 = pnand %p190, %p191
      %p193 = pneg %p192
      // Predicated region
      $region37: #{ffn_forward.1} parent=5 // pred_check
        _
      $region38: #{ffn_forward.1} parent=5 // pred_check_branch
        %195 = sbr.rel (%p192) target = $region40
      $region39: #{ffn_forward.1} parent=5 // pred_region
        %s196 = ssub.s32 %s14, 1
        %s197 = smul.u32 32, %s19
        %p198 = scmp.lt.s32.totalorder %s197, 63
        %s199 = scalar_select %p198, %s197, 63
        %s200 = smul.addr %s199, 4
        %s201 = scalar_lea.vmem %s0, %s200
        %p202 = pneg %p40
        %p203 = pneg %p37
        %p204 = pneg %p61
        %p205 = pneg %p58
        %p206 = pneg %p82
        %p207 = pneg %p79
        %p208 = pneg %p103
        %p209 = pneg %p100
        %p210 = pneg %p124
        %p211 = pneg %p121
        %p212 = pneg %p150
        %p213 = pneg %p147
        %s214 = sand.u32 %s137, 1
        %s215 = scalar_lea.sflag [#allocation3], %s214
        %s216 = sand.u32 %s137, 1
        %s217 = smul.addr %s216, 256
        %s218 = scalar_lea.vmem [#allocation2], %s217
        %s219 = smul.u32 32, %s19
        %p220 = scmp.lt.s32.totalorder %s219, 63
        %s221 = scalar_select %p220, %s219, 63
        %s222 = smul.addr %s221, 4
        %s223 = scalar_lea.vmem %s0, %s222
        %s224 = smul.u32 32, %s19
        %s225 = smul.u32 32, %s19
        %v227 = vld [vmem:[%s223] sm:$0xf]
        %v228 = vld [vmem:[%s223 + $0x4] sm:$0xf]
        %v229 = vld [vmem:[%s223 + $0x8] sm:$0xf]
        %v230 = vld [vmem:[%s223 + $0xc] sm:$0xf]
        %v231 = vld [vmem:[%s223 + $0x10] sm:$0xf]
        %v232 = vld [vmem:[%s223 + $0x14] sm:$0xf]
        %v233 = vld [vmem:[%s223 + $0x18] sm:$0xf]
        %v234 = vld [vmem:[%s223 + $0x1c] sm:$0xf]
        %v235 = vld [vmem:[%s223 + $0x20] sm:$0xf]
        %v236 = vld [vmem:[%s223 + $0x24] sm:$0xf]
        %v237 = vld [vmem:[%s223 + $0x28] sm:$0xf]
        %v238 = vld [vmem:[%s223 + $0x2c] sm:$0xf]
        %v239 = vld [vmem:[%s223 + $0x30] sm:$0xf]
        %v240 = vld [vmem:[%s223 + $0x34] sm:$0xf]
        %v241 = vld [vmem:[%s223 + $0x38] sm:$0xf]
        %v242 = vld [vmem:[%s223 + $0x3c] sm:$0xf]
        %v243 = vld [vmem:[%s223 + $0x40] sm:$0xf]
        %v244 = vld [vmem:[%s223 + $0x44] sm:$0xf]
        %v245 = vld [vmem:[%s223 + $0x48] sm:$0xf]
        %v246 = vld [vmem:[%s223 + $0x4c] sm:$0xf]
        %v247 = vld [vmem:[%s223 + $0x50] sm:$0xf]
        %v248 = vld [vmem:[%s223 + $0x54] sm:$0xf]
        %v249 = vld [vmem:[%s223 + $0x58] sm:$0xf]
        %v250 = vld [vmem:[%s223 + $0x5c] sm:$0xf]
        %v251 = vld [vmem:[%s223 + $0x60] sm:$0xf]
        %v252 = vld [vmem:[%s223 + $0x64] sm:$0xf]
        %v253 = vld [vmem:[%s223 + $0x68] sm:$0xf]
        %v254 = vld [vmem:[%s223 + $0x6c] sm:$0xf]
        %v255 = vld [vmem:[%s223 + $0x70] sm:$0xf]
        %v256 = vld [vmem:[%s223 + $0x74] sm:$0xf]
        %v257 = vld [vmem:[%s223 + $0x78] sm:$0xf]
        %v258 = vld [vmem:[%s223 + $0x7c] sm:$0xf]
        %v259 = vld [vmem:[%s1] sm:$0xff]
        %v260 = vld [vmem:[%s1 + $0x8] sm:$0xff]
        %v261 = vld [vmem:[%s1 + $0x10] sm:$0xff]
        %v262 = vld [vmem:[%s1 + $0x18] sm:$0xff]
        %v263 = vld [vmem:[%s1 + $0x20] sm:$0xff]
        %v264 = vld [vmem:[%s1 + $0x28] sm:$0xff]
        %v265 = vld [vmem:[%s1 + $0x30] sm:$0xff]
        %v266 = vld [vmem:[%s1 + $0x38] sm:$0xff]
        %v267 = vld [vmem:[%s1 + $0x40] sm:$0xff]
        %v268 = vld [vmem:[%s1 + $0x48] sm:$0xff]
        %v269 = vld [vmem:[%s1 + $0x50] sm:$0xff]
        %v270 = vld [vmem:[%s1 + $0x58] sm:$0xff]
        %v271 = vld [vmem:[%s1 + $0x60] sm:$0xff]
        %v272 = vld [vmem:[%s1 + $0x68] sm:$0xff]
        %v273 = vld [vmem:[%s1 + $0x70] sm:$0xff]
        %v274 = vld [vmem:[%s1 + $0x78] sm:$0xff]
        %v275 = vld [vmem:[%s2] sm:$0x3]
        %v276 = vunpack.c.l.bf16 %v275
        %v278 = vlaneseq
        %v279 = vshrl.u32 %v278, 7
        %v280 = vsub.s32 0, %v279
        %v281 = vrot.slane %v276, %v280
        %v282 = vlaneseq
        %v283 = vshrl.u32 %v282, 7
        %v284 = vsub.s32 2, %v283
        %v285 = vrot.slane %v276, %v284
        %v288 = vlaneseq
        %v289 = vshrl.u32 %v288, 7
        %v290 = vsub.s32 0, %v289
        %v291 = vrot.slane %v281, %v290
        %v292 = vlaneseq
        %v293 = vshrl.u32 %v292, 7
        %v294 = vsub.s32 0, %v293
        %v295 = vrot.slane %v285, %v294
        %v328 = vunpack.c.l.b16 %v227
        %v329 = vunpack.c.l.b16 %v228
        %v330 = vunpack.c.l.b16 %v229
        %v331 = vunpack.c.l.b16 %v230
        %v332 = vunpack.c.l.b16 %v231
        %v333 = vunpack.c.l.b16 %v232
        %v334 = vunpack.c.l.b16 %v233
        %v335 = vunpack.c.l.b16 %v234
        %v336 = vunpack.c.l.b16 %v235
        %v337 = vunpack.c.l.b16 %v236
        %v338 = vunpack.c.l.b16 %v237
        %v339 = vunpack.c.l.b16 %v238
        %v340 = vunpack.c.l.b16 %v239
        %v341 = vunpack.c.l.b16 %v240
        %v342 = vunpack.c.l.b16 %v241
        %v343 = vunpack.c.l.b16 %v242
        %v344 = vunpack.c.l.b16 %v243
        %v345 = vunpack.c.l.b16 %v244
        %v346 = vunpack.c.l.b16 %v245
        %v347 = vunpack.c.l.b16 %v246
        %v348 = vunpack.c.l.b16 %v247
        %v349 = vunpack.c.l.b16 %v248
        %v350 = vunpack.c.l.b16 %v249
        %v351 = vunpack.c.l.b16 %v250
        %v352 = vunpack.c.l.b16 %v251
        %v353 = vunpack.c.l.b16 %v252
        %v354 = vunpack.c.l.b16 %v253
        %v355 = vunpack.c.l.b16 %v254
        %v356 = vunpack.c.l.b16 %v255
        %v357 = vunpack.c.l.b16 %v256
        %v358 = vunpack.c.l.b16 %v257
        %v359 = vunpack.c.l.b16 %v258
        %v360 = vpack.c.b16 %v329, %v328
        %v361 = vpack.c.b16 %v331, %v330
        %v362 = vpack.c.b16 %v333, %v332
        %v363 = vpack.c.b16 %v335, %v334
        %v364 = vpack.c.b16 %v337, %v336
        %v365 = vpack.c.b16 %v339, %v338
        %v366 = vpack.c.b16 %v341, %v340
        %v367 = vpack.c.b16 %v343, %v342
        %v368 = vpack.c.b16 %v345, %v344
        %v369 = vpack.c.b16 %v347, %v346
        %v370 = vpack.c.b16 %v349, %v348
        %v371 = vpack.c.b16 %v351, %v350
        %v372 = vpack.c.b16 %v353, %v352
        %v373 = vpack.c.b16 %v355, %v354
        %v374 = vpack.c.b16 %v357, %v356
        %v375 = vpack.c.b16 %v359, %v358
        %v408 = vunpack.c.l.b16 %v259
        %v409 = vunpack.c.h.b16 %v259
        %v410 = vunpack.c.l.b16 %v260
        %v411 = vunpack.c.h.b16 %v260
        %v412 = vunpack.c.l.b16 %v261
        %v413 = vunpack.c.h.b16 %v261
        %v414 = vunpack.c.l.b16 %v262
        %v415 = vunpack.c.h.b16 %v262
        %v416 = vunpack.c.l.b16 %v263
        %v417 = vunpack.c.h.b16 %v263
        %v418 = vunpack.c.l.b16 %v264
        %v419 = vunpack.c.h.b16 %v264
        %v420 = vunpack.c.l.b16 %v265
        %v421 = vunpack.c.h.b16 %v265
        %v422 = vunpack.c.l.b16 %v266
        %v423 = vunpack.c.h.b16 %v266
        %v424 = vunpack.c.l.b16 %v267
        %v425 = vunpack.c.h.b16 %v267
        %v426 = vunpack.c.l.b16 %v268
        %v427 = vunpack.c.h.b16 %v268
        %v428 = vunpack.c.l.b16 %v269
        %v429 = vunpack.c.h.b16 %v269
        %v430 = vunpack.c.l.b16 %v270
        %v431 = vunpack.c.h.b16 %v270
        %v432 = vunpack.c.l.b16 %v271
        %v433 = vunpack.c.h.b16 %v271
        %v434 = vunpack.c.l.b16 %v272
        %v435 = vunpack.c.h.b16 %v272
        %v436 = vunpack.c.l.b16 %v273
        %v437 = vunpack.c.h.b16 %v273
        %v438 = vunpack.c.l.b16 %v274
        %v439 = vunpack.c.h.b16 %v274
        %v440 = vpack.c.b16 %v410, %v408
        %v441 = vpack.c.b16 %v411, %v409
        %v442 = vpack.c.b16 %v414, %v412
        %v443 = vpack.c.b16 %v415, %v413
        %v444 = vpack.c.b16 %v418, %v416
        %v445 = vpack.c.b16 %v419, %v417
        %v446 = vpack.c.b16 %v422, %v420
        %v447 = vpack.c.b16 %v423, %v421
        %v448 = vpack.c.b16 %v426, %v424
        %v449 = vpack.c.b16 %v427, %v425
        %v450 = vpack.c.b16 %v430, %v428
        %v451 = vpack.c.b16 %v431, %v429
        %v452 = vpack.c.b16 %v434, %v432
        %v453 = vpack.c.b16 %v435, %v433
        %v454 = vpack.c.b16 %v438, %v436
        %v455 = vpack.c.b16 %v439, %v437
        %472 = vmatprep.subr.bf16.mxu0 %v441
        %473 = vmatpush1.bf16.msra.mxu0 %v440
        %474 = vmatprep.subr.bf16.mxu0 %v443
        %475 = vmatpush1.bf16.msra.mxu0 %v442
        %476 = vmatprep.subr.bf16.mxu0 %v445
        %477 = vmatpush1.bf16.msra.mxu0 %v444
        %478 = vmatprep.subr.bf16.mxu0 %v447
        %479 = vmatpush1.bf16.msra.mxu0 %v446
        %480 = vmatprep.subr.bf16.mxu0 %v449
        %481 = vmatpush1.bf16.msra.mxu0 %v448
        %482 = vmatprep.subr.bf16.mxu0 %v451
        %483 = vmatpush1.bf16.msra.mxu0 %v450
        %484 = vmatprep.subr.bf16.mxu0 %v453
        %485 = vmatpush1.bf16.msra.mxu0 %v452
        %486 = vmatprep.subr.bf16.mxu0 %v455
        %487 = vmatpush1.bf16.msra.mxu0 %v454
        %488 = vmatprep.subr.bf16.mxu0 0
        %489 = vmatpush1.bf16.msra.mxu0 0
        %490 = vmatprep.subr.bf16.mxu0 0
        %491 = vmatpush1.bf16.msra.mxu0 0
        %492 = vmatprep.subr.bf16.mxu0 0
        %493 = vmatpush1.bf16.msra.mxu0 0
        %494 = vmatprep.subr.bf16.mxu0 0
        %495 = vmatpush1.bf16.msra.mxu0 0
        %496 = vmatprep.subr.bf16.mxu0 0
        %497 = vmatpush1.bf16.msra.mxu0 0
        %498 = vmatprep.subr.bf16.mxu0 0
        %499 = vmatpush1.bf16.msra.mxu0 0
        %500 = vmatprep.subr.bf16.mxu0 0
        %501 = vmatpush1.bf16.msra.mxu0 0
        %502 = vmatprep.subr.bf16.mxu0 0
        %503 = vmatpush1.bf16.msra.mxu0 0
        %504 = vmatprep.mubr.bf16.mxu0 0
        %505 = vmatmul.mubr.bf16.gmra.mrb[0].mxu0 %v360
        %v506 = vpop.f32.mrb[0].mxu0
        %v507 = vadd.f32 %v291, %v506
        %v508 = vpop.f32.mrb[0].mxu0
        %v509 = vadd.f32 %v295, %v508
        %v510 = vpop.f32.mrb[0].mxu0
        %v511 = vadd.f32 %v291, %v510
        %v512 = vpop.f32.mrb[0].mxu0
        %v513 = vadd.f32 %v295, %v512
        %514 = vmatprep.mubr.bf16.mxu0 0
        %515 = vmatmul.mubr.bf16.gmra.mrb[0].mxu0 %v361
        %v516 = vpop.f32.mrb[0].mxu0
        %v517 = vadd.f32 %v291, %v516
        %v518 = vpop.f32.mrb[0].mxu0
        %v519 = vadd.f32 %v295, %v518
        %v520 = vpop.f32.mrb[0].mxu0
        %v521 = vadd.f32 %v291, %v520
        %v522 = vpop.f32.mrb[0].mxu0
        %v523 = vadd.f32 %v295, %v522
        %524 = vmatprep.mubr.bf16.mxu0 0
        %525 = vmatmul.mubr.bf16.gmra.mrb[0].mxu0 %v362
        %v526 = vpop.f32.mrb[0].mxu0
        %v527 = vadd.f32 %v291, %v526
        %v528 = vpop.f32.mrb[0].mxu0
        %v529 = vadd.f32 %v295, %v528
        %v530 = vpop.f32.mrb[0].mxu0
        %v531 = vadd.f32 %v291, %v530
        %v532 = vpop.f32.mrb[0].mxu0
        %v533 = vadd.f32 %v295, %v532
        %534 = vmatprep.mubr.bf16.mxu0 0
        %535 = vmatmul.mubr.bf16.gmra.mrb[0].mxu0 %v363
        %v536 = vpop.f32.mrb[0].mxu0
        %v537 = vadd.f32 %v291, %v536
        %v538 = vpop.f32.mrb[0].mxu0
        %v539 = vadd.f32 %v295, %v538
        %v540 = vpop.f32.mrb[0].mxu0
        %v541 = vadd.f32 %v291, %v540
        %v542 = vpop.f32.mrb[0].mxu0
        %v543 = vadd.f32 %v295, %v542
        %544 = vmatprep.mubr.bf16.mxu0 0
        %545 = vmatmul.mubr.bf16.gmra.mrb[0].mxu0 %v364
        %v546 = vpop.f32.mrb[0].mxu0
        %v547 = vadd.f32 %v291, %v546
        %v548 = vpop.f32.mrb[0].mxu0
        %v549 = vadd.f32 %v295, %v548
        %v550 = vpop.f32.mrb[0].mxu0
        %v551 = vadd.f32 %v291, %v550
        %v552 = vpop.f32.mrb[0].mxu0
        %v553 = vadd.f32 %v295, %v552
        %554 = vmatprep.mubr.bf16.mxu0 0
        %555 = vmatmul.mubr.bf16.gmra.mrb[0].mxu0 %v365
        %v556 = vpop.f32.mrb[0].mxu0
        %v557 = vadd.f32 %v291, %v556
        %v558 = vpop.f32.mrb[0].mxu0
        %v559 = vadd.f32 %v295, %v558
        %v560 = vpop.f32.mrb[0].mxu0
        %v561 = vadd.f32 %v291, %v560
        %v562 = vpop.f32.mrb[0].mxu0
        %v563 = vadd.f32 %v295, %v562
        %564 = vmatprep.mubr.bf16.mxu0 0
        %565 = vmatmul.mubr.bf16.gmra.mrb[0].mxu0 %v366
        %v566 = vpop.f32.mrb[0].mxu0
        %v567 = vadd.f32 %v291, %v566
        %v568 = vpop.f32.mrb[0].mxu0
        %v569 = vadd.f32 %v295, %v568
        %v570 = vpop.f32.mrb[0].mxu0
        %v571 = vadd.f32 %v291, %v570
        %v572 = vpop.f32.mrb[0].mxu0
        %v573 = vadd.f32 %v295, %v572
        %574 = vmatprep.mubr.bf16.mxu0 0
        %575 = vmatmul.mubr.bf16.gmra.mrb[0].mxu0 %v367
        %v576 = vpop.f32.mrb[0].mxu0
        %v577 = vadd.f32 %v291, %v576
        %v578 = vpop.f32.mrb[0].mxu0
        %v579 = vadd.f32 %v295, %v578
        %v580 = vpop.f32.mrb[0].mxu0
        %v581 = vadd.f32 %v291, %v580
        %v582 = vpop.f32.mrb[0].mxu0
        %v583 = vadd.f32 %v295, %v582
        %584 = vmatprep.mubr.bf16.mxu0 0
        %585 = vmatmul.mubr.bf16.gmra.mrb[0].mxu0 %v368
        %v586 = vpop.f32.mrb[0].mxu0
        %v587 = vadd.f32 %v291, %v586
        %v588 = vpop.f32.mrb[0].mxu0
        %v589 = vadd.f32 %v295, %v588
        %v590 = vpop.f32.mrb[0].mxu0
        %v591 = vadd.f32 %v291, %v590
        %v592 = vpop.f32.mrb[0].mxu0
        %v593 = vadd.f32 %v295, %v592
        %594 = vmatprep.mubr.bf16.mxu0 0
        %595 = vmatmul.mubr.bf16.gmra.mrb[0].mxu0 %v369
        %v596 = vpop.f32.mrb[0].mxu0
        %v597 = vadd.f32 %v291, %v596
        %v598 = vpop.f32.mrb[0].mxu0
        %v599 = vadd.f32 %v295, %v598
        %v600 = vpop.f32.mrb[0].mxu0
        %v601 = vadd.f32 %v291, %v600
        %v602 = vpop.f32.mrb[0].mxu0
        %v603 = vadd.f32 %v295, %v602
        %604 = vmatprep.mubr.bf16.mxu0 0
        %605 = vmatmul.mubr.bf16.gmra.mrb[0].mxu0 %v370
        %v606 = vpop.f32.mrb[0].mxu0
        %v607 = vadd.f32 %v291, %v606
        %v608 = vpop.f32.mrb[0].mxu0
        %v609 = vadd.f32 %v295, %v608
        %v610 = vpop.f32.mrb[0].mxu0
        %v611 = vadd.f32 %v291, %v610
        %v612 = vpop.f32.mrb[0].mxu0
        %v613 = vadd.f32 %v295, %v612
        %614 = vmatprep.mubr.bf16.mxu0 0
        %615 = vmatmul.mubr.bf16.gmra.mrb[0].mxu0 %v371
        %v616 = vpop.f32.mrb[0].mxu0
        %v617 = vadd.f32 %v291, %v616
        %v618 = vpop.f32.mrb[0].mxu0
        %v619 = vadd.f32 %v295, %v618
        %v620 = vpop.f32.mrb[0].mxu0
        %v621 = vadd.f32 %v291, %v620
        %v622 = vpop.f32.mrb[0].mxu0
        %v623 = vadd.f32 %v295, %v622
        %624 = vmatprep.mubr.bf16.mxu0 0
        %625 = vmatmul.mubr.bf16.gmra.mrb[0].mxu0 %v372
        %v626 = vpop.f32.mrb[0].mxu0
        %v627 = vadd.f32 %v291, %v626
        %v628 = vpop.f32.mrb[0].mxu0
        %v629 = vadd.f32 %v295, %v628
        %v630 = vpop.f32.mrb[0].mxu0
        %v631 = vadd.f32 %v291, %v630
        %v632 = vpop.f32.mrb[0].mxu0
        %v633 = vadd.f32 %v295, %v632
        %634 = vmatprep.mubr.bf16.mxu0 0
        %635 = vmatmul.mubr.bf16.gmra.mrb[0].mxu0 %v373
        %v636 = vpop.f32.mrb[0].mxu0
        %v637 = vadd.f32 %v291, %v636
        %v638 = vpop.f32.mrb[0].mxu0
        %v639 = vadd.f32 %v295, %v638
        %v640 = vpop.f32.mrb[0].mxu0
        %v641 = vadd.f32 %v291, %v640
        %v642 = vpop.f32.mrb[0].mxu0
        %v643 = vadd.f32 %v295, %v642
        %644 = vmatprep.mubr.bf16.mxu0 0
        %645 = vmatmul.mubr.bf16.gmra.mrb[0].mxu0 %v374
        %v646 = vpop.f32.mrb[0].mxu0
        %v647 = vadd.f32 %v291, %v646
        %v648 = vpop.f32.mrb[0].mxu0
        %v649 = vadd.f32 %v295, %v648
        %v650 = vpop.f32.mrb[0].mxu0
        %v651 = vadd.f32 %v291, %v650
        %v652 = vpop.f32.mrb[0].mxu0
        %v653 = vadd.f32 %v295, %v652
        %654 = vmatprep.mubr.bf16.mxu0 0
        %655 = vmatmul.mubr.bf16.gmra.mrb[0].mxu0 %v375
        %v656 = vpop.f32.mrb[0].mxu0
        %v657 = vadd.f32 %v291, %v656
        %v658 = vpop.f32.mrb[0].mxu0
        %v659 = vadd.f32 %v295, %v658
        %v660 = vpop.f32.mrb[0].mxu0
        %v661 = vadd.f32 %v291, %v660
        %v662 = vpop.f32.mrb[0].mxu0
        %v663 = vadd.f32 %v295, %v662
        %664 = vdwg.mxu0
        %v665 = vmul.f32 %v507, 0.5
        %v666 = vmul.f32 %v509, 0.5
        %v667 = vmul.f32 %v511, 0.5
        %v668 = vmul.f32 %v513, 0.5
        %v669 = vmul.f32 %v517, 0.5
        %v670 = vmul.f32 %v519, 0.5
        %v671 = vmul.f32 %v521, 0.5
        %v672 = vmul.f32 %v523, 0.5
        %v673 = vmul.f32 %v527, 0.5
        %v674 = vmul.f32 %v529, 0.5
        %v675 = vmul.f32 %v531, 0.5
        %v676 = vmul.f32 %v533, 0.5
        %v677 = vmul.f32 %v537, 0.5
        %v678 = vmul.f32 %v539, 0.5
        %v679 = vmul.f32 %v541, 0.5
        %v680 = vmul.f32 %v543, 0.5
        %v681 = vmul.f32 %v547, 0.5
        %v682 = vmul.f32 %v549, 0.5
        %v683 = vmul.f32 %v551, 0.5
        %v684 = vmul.f32 %v553, 0.5
        %v685 = vmul.f32 %v557, 0.5
        %v686 = vmul.f32 %v559, 0.5
        %v687 = vmul.f32 %v561, 0.5
        %v688 = vmul.f32 %v563, 0.5
        %v689 = vmul.f32 %v567, 0.5
        %v690 = vmul.f32 %v569, 0.5
        %v691 = vmul.f32 %v571, 0.5
        %v692 = vmul.f32 %v573, 0.5
        %v693 = vmul.f32 %v577, 0.5
        %v694 = vmul.f32 %v579, 0.5
        %v695 = vmul.f32 %v581, 0.5
        %v696 = vmul.f32 %v583, 0.5
        %v697 = vmul.f32 %v587, 0.5
        %v698 = vmul.f32 %v589, 0.5
        %v699 = vmul.f32 %v591, 0.5
        %v700 = vmul.f32 %v593, 0.5
        %v701 = vmul.f32 %v597, 0.5
        %v702 = vmul.f32 %v599, 0.5
        %v703 = vmul.f32 %v601, 0.5
        %v704 = vmul.f32 %v603, 0.5
        %v705 = vmul.f32 %v607, 0.5
        %v706 = vmul.f32 %v609, 0.5
        %v707 = vmul.f32 %v611, 0.5
        %v708 = vmul.f32 %v613, 0.5
        %v709 = vmul.f32 %v617, 0.5
        %v710 = vmul.f32 %v619, 0.5
        %v711 = vmul.f32 %v621, 0.5
        %v712 = vmul.f32 %v623, 0.5
        %v713 = vmul.f32 %v627, 0.5
        %v714 = vmul.f32 %v629, 0.5
        %v715 = vmul.f32 %v631, 0.5
        %v716 = vmul.f32 %v633, 0.5
        %v717 = vmul.f32 %v637, 0.5
        %v718 = vmul.f32 %v639, 0.5
        %v719 = vmul.f32 %v641, 0.5
        %v720 = vmul.f32 %v643, 0.5
        %v721 = vmul.f32 %v647, 0.5
        %v722 = vmul.f32 %v649, 0.5
        %v723 = vmul.f32 %v651, 0.5
        %v724 = vmul.f32 %v653, 0.5
        %v725 = vmul.f32 %v657, 0.5
        %v726 = vmul.f32 %v659, 0.5
        %v727 = vmul.f32 %v661, 0.5
        %v728 = vmul.f32 %v663, 0.5
        %v729 = vmul.f32 %v507, 0.044715
        %v730 = vmul.f32 %v509, 0.044715
        %v731 = vmul.f32 %v511, 0.044715
        %v732 = vmul.f32 %v513, 0.044715
        %v733 = vmul.f32 %v517, 0.044715
        %v734 = vmul.f32 %v519, 0.044715
        %v735 = vmul.f32 %v521, 0.044715
        %v736 = vmul.f32 %v523, 0.044715
        %v737 = vmul.f32 %v527, 0.044715
        %v738 = vmul.f32 %v529, 0.044715
        %v739 = vmul.f32 %v531, 0.044715
        %v740 = vmul.f32 %v533, 0.044715
        %v741 = vmul.f32 %v537, 0.044715
        %v742 = vmul.f32 %v539, 0.044715
        %v743 = vmul.f32 %v541, 0.044715
        %v744 = vmul.f32 %v543, 0.044715
        %v745 = vmul.f32 %v547, 0.044715
        %v746 = vmul.f32 %v549, 0.044715
        %v747 = vmul.f32 %v551, 0.044715
        %v748 = vmul.f32 %v553, 0.044715
        %v749 = vmul.f32 %v557, 0.044715
        %v750 = vmul.f32 %v559, 0.044715
        %v751 = vmul.f32 %v561, 0.044715
        %v752 = vmul.f32 %v563, 0.044715
        %v753 = vmul.f32 %v567, 0.044715
        %v754 = vmul.f32 %v569, 0.044715
        %v755 = vmul.f32 %v571, 0.044715
        %v756 = vmul.f32 %v573, 0.044715
        %v757 = vmul.f32 %v577, 0.044715
        %v758 = vmul.f32 %v579, 0.044715
        %v759 = vmul.f32 %v581, 0.044715
        %v760 = vmul.f32 %v583, 0.044715
        %v761 = vmul.f32 %v587, 0.044715
        %v762 = vmul.f32 %v589, 0.044715
        %v763 = vmul.f32 %v591, 0.044715
        %v764 = vmul.f32 %v593, 0.044715
        %v765 = vmul.f32 %v597, 0.044715
        %v766 = vmul.f32 %v599, 0.044715
        %v767 = vmul.f32 %v601, 0.044715
        %v768 = vmul.f32 %v603, 0.044715
        %v769 = vmul.f32 %v607, 0.044715
        %v770 = vmul.f32 %v609, 0.044715
        %v771 = vmul.f32 %v611, 0.044715
        %v772 = vmul.f32 %v613, 0.044715
        %v773 = vmul.f32 %v617, 0.044715
        %v774 = vmul.f32 %v619, 0.044715
        %v775 = vmul.f32 %v621, 0.044715
        %v776 = vmul.f32 %v623, 0.044715
        %v777 = vmul.f32 %v627, 0.044715
        %v778 = vmul.f32 %v629, 0.044715
        %v779 = vmul.f32 %v631, 0.044715
        %v780 = vmul.f32 %v633, 0.044715
        %v781 = vmul.f32 %v637, 0.044715
        %v782 = vmul.f32 %v639, 0.044715
        %v783 = vmul.f32 %v641, 0.044715
        %v784 = vmul.f32 %v643, 0.044715
        %v785 = vmul.f32 %v647, 0.044715
        %v786 = vmul.f32 %v649, 0.044715
        %v787 = vmul.f32 %v651, 0.044715
        %v788 = vmul.f32 %v653, 0.044715
        %v789 = vmul.f32 %v657, 0.044715
        %v790 = vmul.f32 %v659, 0.044715
        %v791 = vmul.f32 %v661, 0.044715
        %v792 = vmul.f32 %v663, 0.044715
        %v793 = vmul.f32 %v729, %v507
        %v794 = vmul.f32 %v730, %v509
        %v795 = vmul.f32 %v731, %v511
        %v796 = vmul.f32 %v732, %v513
        %v797 = vmul.f32 %v733, %v517
        %v798 = vmul.f32 %v734, %v519
        %v799 = vmul.f32 %v735, %v521
        %v800 = vmul.f32 %v736, %v523
        %v801 = vmul.f32 %v737, %v527
        %v802 = vmul.f32 %v738, %v529
        %v803 = vmul.f32 %v739, %v531
        %v804 = vmul.f32 %v740, %v533
        %v805 = vmul.f32 %v741, %v537
        %v806 = vmul.f32 %v742, %v539
        %v807 = vmul.f32 %v743, %v541
        %v808 = vmul.f32 %v744, %v543
        %v809 = vmul.f32 %v745, %v547
        %v810 = vmul.f32 %v746, %v549
        %v811 = vmul.f32 %v747, %v551
        %v812 = vmul.f32 %v748, %v553
        %v813 = vmul.f32 %v749, %v557
        %v814 = vmul.f32 %v750, %v559
        %v815 = vmul.f32 %v751, %v561
        %v816 = vmul.f32 %v752, %v563
        %v817 = vmul.f32 %v753, %v567
        %v818 = vmul.f32 %v754, %v569
        %v819 = vmul.f32 %v755, %v571
        %v820 = vmul.f32 %v756, %v573
        %v821 = vmul.f32 %v757, %v577
        %v822 = vmul.f32 %v758, %v579
        %v823 = vmul.f32 %v759, %v581
        %v824 = vmul.f32 %v760, %v583
        %v825 = vmul.f32 %v761, %v587
        %v826 = vmul.f32 %v762, %v589
        %v827 = vmul.f32 %v763, %v591
        %v828 = vmul.f32 %v764, %v593
        %v829 = vmul.f32 %v765, %v597
        %v830 = vmul.f32 %v766, %v599
        %v831 = vmul.f32 %v767, %v601
        %v832 = vmul.f32 %v768, %v603
        %v833 = vmul.f32 %v769, %v607
        %v834 = vmul.f32 %v770, %v609
        %v835 = vmul.f32 %v771, %v611
        %v836 = vmul.f32 %v772, %v613
        %v837 = vmul.f32 %v773, %v617
        %v838 = vmul.f32 %v774, %v619
        %v839 = vmul.f32 %v775, %v621
        %v840 = vmul.f32 %v776, %v623
        %v841 = vmul.f32 %v777, %v627
        %v842 = vmul.f32 %v778, %v629
        %v843 = vmul.f32 %v779, %v631
        %v844 = vmul.f32 %v780, %v633
        %v845 = vmul.f32 %v781, %v637
        %v846 = vmul.f32 %v782, %v639
        %v847 = vmul.f32 %v783, %v641
        %v848 = vmul.f32 %v784, %v643
        %v849 = vmul.f32 %v785, %v647
        %v850 = vmul.f32 %v786, %v649
        %v851 = vmul.f32 %v787, %v651
        %v852 = vmul.f32 %v788, %v653
        %v853 = vmul.f32 %v789, %v657
        %v854 = vmul.f32 %v790, %v659
        %v855 = vmul.f32 %v791, %v661
        %v856 = vmul.f32 %v792, %v663
        %v857 = vmul.f32 %v793, %v507
        %v858 = vmul.f32 %v794, %v509
        %v859 = vmul.f32 %v795, %v511
        %v860 = vmul.f32 %v796, %v513
        %v861 = vmul.f32 %v797, %v517
        %v862 = vmul.f32 %v798, %v519
        %v863 = vmul.f32 %v799, %v521
        %v864 = vmul.f32 %v800, %v523
        %v865 = vmul.f32 %v801, %v527
        %v866 = vmul.f32 %v802, %v529
        %v867 = vmul.f32 %v803, %v531
        %v868 = vmul.f32 %v804, %v533
        %v869 = vmul.f32 %v805, %v537
        %v870 = vmul.f32 %v806, %v539
        %v871 = vmul.f32 %v807, %v541
        %v872 = vmul.f32 %v808, %v543
        %v873 = vmul.f32 %v809, %v547
        %v874 = vmul.f32 %v810, %v549
        %v875 = vmul.f32 %v811, %v551
        %v876 = vmul.f32 %v812, %v553
        %v877 = vmul.f32 %v813, %v557
        %v878 = vmul.f32 %v814, %v559
        %v879 = vmul.f32 %v815, %v561
        %v880 = vmul.f32 %v816, %v563
        %v881 = vmul.f32 %v817, %v567
        %v882 = vmul.f32 %v818, %v569
        %v883 = vmul.f32 %v819, %v571
        %v884 = vmul.f32 %v820, %v573
        %v885 = vmul.f32 %v821, %v577
        %v886 = vmul.f32 %v822, %v579
        %v887 = vmul.f32 %v823, %v581
        %v888 = vmul.f32 %v824, %v583
        %v889 = vmul.f32 %v825, %v587
        %v890 = vmul.f32 %v826, %v589
        %v891 = vmul.f32 %v827, %v591
        %v892 = vmul.f32 %v828, %v593
        %v893 = vmul.f32 %v829, %v597
        %v894 = vmul.f32 %v830, %v599
        %v895 = vmul.f32 %v831, %v601
        %v896 = vmul.f32 %v832, %v603
        %v897 = vmul.f32 %v833, %v607
        %v898 = vmul.f32 %v834, %v609
        %v899 = vmul.f32 %v835, %v611
        %v900 = vmul.f32 %v836, %v613
        %v901 = vmul.f32 %v837, %v617
        %v902 = vmul.f32 %v838, %v619
        %v903 = vmul.f32 %v839, %v621
        %v904 = vmul.f32 %v840, %v623
        %v905 = vmul.f32 %v841, %v627
        %v906 = vmul.f32 %v842, %v629
        %v907 = vmul.f32 %v843, %v631
        %v908 = vmul.f32 %v844, %v633
        %v909 = vmul.f32 %v845, %v637
        %v910 = vmul.f32 %v846, %v639
        %v911 = vmul.f32 %v847, %v641
        %v912 = vmul.f32 %v848, %v643
        %v913 = vmul.f32 %v849, %v647
        %v914 = vmul.f32 %v850, %v649
        %v915 = vmul.f32 %v851, %v651
        %v916 = vmul.f32 %v852, %v653
        %v917 = vmul.f32 %v853, %v657
        %v918 = vmul.f32 %v854, %v659
        %v919 = vmul.f32 %v855, %v661
        %v920 = vmul.f32 %v856, %v663
        %v921 = vadd.f32 %v507, %v857
        %v922 = vadd.f32 %v509, %v858
        %v923 = vadd.f32 %v511, %v859
        %v924 = vadd.f32 %v513, %v860
        %v925 = vadd.f32 %v517, %v861
        %v926 = vadd.f32 %v519, %v862
        %v927 = vadd.f32 %v521, %v863
        %v928 = vadd.f32 %v523, %v864
        %v929 = vadd.f32 %v527, %v865
        %v930 = vadd.f32 %v529, %v866
        %v931 = vadd.f32 %v531, %v867
        %v932 = vadd.f32 %v533, %v868
        %v933 = vadd.f32 %v537, %v869
        %v934 = vadd.f32 %v539, %v870
        %v935 = vadd.f32 %v541, %v871
        %v936 = vadd.f32 %v543, %v872
        %v937 = vadd.f32 %v547, %v873
        %v938 = vadd.f32 %v549, %v874
        %v939 = vadd.f32 %v551, %v875
        %v940 = vadd.f32 %v553, %v876
        %v941 = vadd.f32 %v557, %v877
        %v942 = vadd.f32 %v559, %v878
        %v943 = vadd.f32 %v561, %v879
        %v944 = vadd.f32 %v563, %v880
        %v945 = vadd.f32 %v567, %v881
        %v946 = vadd.f32 %v569, %v882
        %v947 = vadd.f32 %v571, %v883
        %v948 = vadd.f32 %v573, %v884
        %v949 = vadd.f32 %v577, %v885
        %v950 = vadd.f32 %v579, %v886
        %v951 = vadd.f32 %v581, %v887
        %v952 = vadd.f32 %v583, %v888
        %v953 = vadd.f32 %v587, %v889
        %v954 = vadd.f32 %v589, %v890
        %v955 = vadd.f32 %v591, %v891
        %v956 = vadd.f32 %v593, %v892
        %v957 = vadd.f32 %v597, %v893
        %v958 = vadd.f32 %v599, %v894
        %v959 = vadd.f32 %v601, %v895
        %v960 = vadd.f32 %v603, %v896
        %v961 = vadd.f32 %v607, %v897
        %v962 = vadd.f32 %v609, %v898
        %v963 = vadd.f32 %v611, %v899
        %v964 = vadd.f32 %v613, %v900
        %v965 = vadd.f32 %v617, %v901
        %v966 = vadd.f32 %v619, %v902
        %v967 = vadd.f32 %v621, %v903
        %v968 = vadd.f32 %v623, %v904
        %v969 = vadd.f32 %v627, %v905
        %v970 = vadd.f32 %v629, %v906
        %v971 = vadd.f32 %v631, %v907
        %v972 = vadd.f32 %v633, %v908
        %v973 = vadd.f32 %v637, %v909
        %v974 = vadd.f32 %v639, %v910
        %v975 = vadd.f32 %v641, %v911
        %v976 = vadd.f32 %v643, %v912
        %v977 = vadd.f32 %v647, %v913
        %v978 = vadd.f32 %v649, %v914
        %v979 = vadd.f32 %v651, %v915
        %v980 = vadd.f32 %v653, %v916
        %v981 = vadd.f32 %v657, %v917
        %v982 = vadd.f32 %v659, %v918
        %v983 = vadd.f32 %v661, %v919
        %v984 = vadd.f32 %v663, %v920
        %v985 = vmul.f32 %v921, 0.7978846
        %v986 = vmul.f32 %v922, 0.7978846
        %v987 = vmul.f32 %v923, 0.7978846
        %v988 = vmul.f32 %v924, 0.7978846
        %v989 = vmul.f32 %v925, 0.7978846
        %v990 = vmul.f32 %v926, 0.7978846
        %v991 = vmul.f32 %v927, 0.7978846
        %v992 = vmul.f32 %v928, 0.7978846
        %v993 = vmul.f32 %v929, 0.7978846
        %v994 = vmul.f32 %v930, 0.7978846
        %v995 = vmul.f32 %v931, 0.7978846
        %v996 = vmul.f32 %v932, 0.7978846
        %v997 = vmul.f32 %v933, 0.7978846
        %v998 = vmul.f32 %v934, 0.7978846
        %v999 = vmul.f32 %v935, 0.7978846
        %v1000 = vmul.f32 %v936, 0.7978846
        %v1001 = vmul.f32 %v937, 0.7978846
        %v1002 = vmul.f32 %v938, 0.7978846
        %v1003 = vmul.f32 %v939, 0.7978846
        %v1004 = vmul.f32 %v940, 0.7978846
        %v1005 = vmul.f32 %v941, 0.7978846
        %v1006 = vmul.f32 %v942, 0.7978846
        %v1007 = vmul.f32 %v943, 0.7978846
        %v1008 = vmul.f32 %v944, 0.7978846
        %v1009 = vmul.f32 %v945, 0.7978846
        %v1010 = vmul.f32 %v946, 0.7978846
        %v1011 = vmul.f32 %v947, 0.7978846
        %v1012 = vmul.f32 %v948, 0.7978846
        %v1013 = vmul.f32 %v949, 0.7978846
        %v1014 = vmul.f32 %v950, 0.7978846
        %v1015 = vmul.f32 %v951, 0.7978846
        %v1016 = vmul.f32 %v952, 0.7978846
        %v1017 = vmul.f32 %v953, 0.7978846
        %v1018 = vmul.f32 %v954, 0.7978846
        %v1019 = vmul.f32 %v955, 0.7978846
        %v1020 = vmul.f32 %v956, 0.7978846
        %v1021 = vmul.f32 %v957, 0.7978846
        %v1022 = vmul.f32 %v958, 0.7978846
        %v1023 = vmul.f32 %v959, 0.7978846
        %v1024 = vmul.f32 %v960, 0.7978846
        %v1025 = vmul.f32 %v961, 0.7978846
        %v1026 = vmul.f32 %v962, 0.7978846
        %v1027 = vmul.f32 %v963, 0.7978846
        %v1028 = vmul.f32 %v964, 0.7978846
        %v1029 = vmul.f32 %v965, 0.7978846
        %v1030 = vmul.f32 %v966, 0.7978846
        %v1031 = vmul.f32 %v967, 0.7978846
        %v1032 = vmul.f32 %v968, 0.7978846
        %v1033 = vmul.f32 %v969, 0.7978846
        %v1034 = vmul.f32 %v970, 0.7978846
        %v1035 = vmul.f32 %v971, 0.7978846
        %v1036 = vmul.f32 %v972, 0.7978846
        %v1037 = vmul.f32 %v973, 0.7978846
        %v1038 = vmul.f32 %v974, 0.7978846
        %v1039 = vmul.f32 %v975, 0.7978846
        %v1040 = vmul.f32 %v976, 0.7978846
        %v1041 = vmul.f32 %v977, 0.7978846
        %v1042 = vmul.f32 %v978, 0.7978846
        %v1043 = vmul.f32 %v979, 0.7978846
        %v1044 = vmul.f32 %v980, 0.7978846
        %v1045 = vmul.f32 %v981, 0.7978846
        %v1046 = vmul.f32 %v982, 0.7978846
        %v1047 = vmul.f32 %v983, 0.7978846
        %v1048 = vmul.f32 %v984, 0.7978846
        %v1049 = vtanh.pop %v985
        %v1050 = vtanh.pop %v986
        %v1051 = vtanh.pop %v987
        %v1052 = vtanh.pop %v988
        %v1053 = vtanh.pop %v989
        %v1054 = vtanh.pop %v990
        %v1055 = vtanh.pop %v991
        %v1056 = vtanh.pop %v992
        %v1057 = vtanh.pop %v993
        %v1058 = vtanh.pop %v994
        %v1059 = vtanh.pop %v995
        %v1060 = vtanh.pop %v996
        %v1061 = vtanh.pop %v997
        %v1062 = vtanh.pop %v998
        %v1063 = vtanh.pop %v999
        %v1064 = vtanh.pop %v1000
        %v1065 = vtanh.pop %v1001
        %v1066 = vtanh.pop %v1002
        %v1067 = vtanh.pop %v1003
        %v1068 = vtanh.pop %v1004
        %v1069 = vtanh.pop %v1005
        %v1070 = vtanh.pop %v1006
        %v1071 = vtanh.pop %v1007
        %v1072 = vtanh.pop %v1008
        %v1073 = vtanh.pop %v1009
        %v1074 = vtanh.pop %v1010
        %v1075 = vtanh.pop %v1011
        %v1076 = vtanh.pop %v1012
        %v1077 = vtanh.pop %v1013
        %v1078 = vtanh.pop %v1014
        %v1079 = vtanh.pop %v1015
        %v1080 = vtanh.pop %v1016
        %v1081 = vtanh.pop %v1017
        %v1082 = vtanh.pop %v1018
        %v1083 = vtanh.pop %v1019
        %v1084 = vtanh.pop %v1020
        %v1085 = vtanh.pop %v1021
        %v1086 = vtanh.pop %v1022
        %v1087 = vtanh.pop %v1023
        %v1088 = vtanh.pop %v1024
        %v1089 = vtanh.pop %v1025
        %v1090 = vtanh.pop %v1026
        %v1091 = vtanh.pop %v1027
        %v1092 = vtanh.pop %v1028
        %v1093 = vtanh.pop %v1029
        %v1094 = vtanh.pop %v1030
        %v1095 = vtanh.pop %v1031
        %v1096 = vtanh.pop %v1032
        %v1097 = vtanh.pop %v1033
        %v1098 = vtanh.pop %v1034
        %v1099 = vtanh.pop %v1035
        %v1100 = vtanh.pop %v1036
        %v1101 = vtanh.pop %v1037
        %v1102 = vtanh.pop %v1038
        %v1103 = vtanh.pop %v1039
        %v1104 = vtanh.pop %v1040
        %v1105 = vtanh.pop %v1041
        %v1106 = vtanh.pop %v1042
        %v1107 = vtanh.pop %v1043
        %v1108 = vtanh.pop %v1044
        %v1109 = vtanh.pop %v1045
        %v1110 = vtanh.pop %v1046
        %v1111 = vtanh.pop %v1047
        %v1112 = vtanh.pop %v1048
        %v1113 = vadd.f32 %v1049, 1.0
        %v1114 = vadd.f32 %v1050, 1.0
        %v1115 = vadd.f32 %v1051, 1.0
        %v1116 = vadd.f32 %v1052, 1.0
        %v1117 = vadd.f32 %v1053, 1.0
        %v1118 = vadd.f32 %v1054, 1.0
        %v1119 = vadd.f32 %v1055, 1.0
        %v1120 = vadd.f32 %v1056, 1.0
        %v1121 = vadd.f32 %v1057, 1.0
        %v1122 = vadd.f32 %v1058, 1.0
        %v1123 = vadd.f32 %v1059, 1.0
        %v1124 = vadd.f32 %v1060, 1.0
        %v1125 = vadd.f32 %v1061, 1.0
        %v1126 = vadd.f32 %v1062, 1.0
        %v1127 = vadd.f32 %v1063, 1.0
        %v1128 = vadd.f32 %v1064, 1.0
        %v1129 = vadd.f32 %v1065, 1.0
        %v1130 = vadd.f32 %v1066, 1.0
        %v1131 = vadd.f32 %v1067, 1.0
        %v1132 = vadd.f32 %v1068, 1.0
        %v1133 = vadd.f32 %v1069, 1.0
        %v1134 = vadd.f32 %v1070, 1.0
        %v1135 = vadd.f32 %v1071, 1.0
        %v1136 = vadd.f32 %v1072, 1.0
        %v1137 = vadd.f32 %v1073, 1.0
        %v1138 = vadd.f32 %v1074, 1.0
        %v1139 = vadd.f32 %v1075, 1.0
        %v1140 = vadd.f32 %v1076, 1.0
        %v1141 = vadd.f32 %v1077, 1.0
        %v1142 = vadd.f32 %v1078, 1.0
        %v1143 = vadd.f32 %v1079, 1.0
        %v1144 = vadd.f32 %v1080, 1.0
        %v1145 = vadd.f32 %v1081, 1.0
        %v1146 = vadd.f32 %v1082, 1.0
        %v1147 = vadd.f32 %v1083, 1.0
        %v1148 = vadd.f32 %v1084, 1.0
        %v1149 = vadd.f32 %v1085, 1.0
        %v1150 = vadd.f32 %v1086, 1.0
        %v1151 = vadd.f32 %v1087, 1.0
        %v1152 = vadd.f32 %v1088, 1.0
        %v1153 = vadd.f32 %v1089, 1.0
        %v1154 = vadd.f32 %v1090, 1.0
        %v1155 = vadd.f32 %v1091, 1.0
        %v1156 = vadd.f32 %v1092, 1.0
        %v1157 = vadd.f32 %v1093, 1.0
        %v1158 = vadd.f32 %v1094, 1.0
        %v1159 = vadd.f32 %v1095, 1.0
        %v1160 = vadd.f32 %v1096, 1.0
        %v1161 = vadd.f32 %v1097, 1.0
        %v1162 = vadd.f32 %v1098, 1.0
        %v1163 = vadd.f32 %v1099, 1.0
        %v1164 = vadd.f32 %v1100, 1.0
        %v1165 = vadd.f32 %v1101, 1.0
        %v1166 = vadd.f32 %v1102, 1.0
        %v1167 = vadd.f32 %v1103, 1.0
        %v1168 = vadd.f32 %v1104, 1.0
        %v1169 = vadd.f32 %v1105, 1.0
        %v1170 = vadd.f32 %v1106, 1.0
        %v1171 = vadd.f32 %v1107, 1.0
        %v1172 = vadd.f32 %v1108, 1.0
        %v1173 = vadd.f32 %v1109, 1.0
        %v1174 = vadd.f32 %v1110, 1.0
        %v1175 = vadd.f32 %v1111, 1.0
        %v1176 = vadd.f32 %v1112, 1.0
        %v1177 = vmul.f32 %v665, %v1113
        %v1178 = vmul.f32 %v666, %v1114
        %v1179 = vmul.f32 %v667, %v1115
        %v1180 = vmul.f32 %v668, %v1116
        %v1181 = vmul.f32 %v669, %v1117
        %v1182 = vmul.f32 %v670, %v1118
        %v1183 = vmul.f32 %v671, %v1119
        %v1184 = vmul.f32 %v672, %v1120
        %v1185 = vmul.f32 %v673, %v1121
        %v1186 = vmul.f32 %v674, %v1122
        %v1187 = vmul.f32 %v675, %v1123
        %v1188 = vmul.f32 %v676, %v1124
        %v1189 = vmul.f32 %v677, %v1125
        %v1190 = vmul.f32 %v678, %v1126
        %v1191 = vmul.f32 %v679, %v1127
        %v1192 = vmul.f32 %v680, %v1128
        %v1193 = vmul.f32 %v681, %v1129
        %v1194 = vmul.f32 %v682, %v1130
        %v1195 = vmul.f32 %v683, %v1131
        %v1196 = vmul.f32 %v684, %v1132
        %v1197 = vmul.f32 %v685, %v1133
        %v1198 = vmul.f32 %v686, %v1134
        %v1199 = vmul.f32 %v687, %v1135
        %v1200 = vmul.f32 %v688, %v1136
        %v1201 = vmul.f32 %v689, %v1137
        %v1202 = vmul.f32 %v690, %v1138
        %v1203 = vmul.f32 %v691, %v1139
        %v1204 = vmul.f32 %v692, %v1140
        %v1205 = vmul.f32 %v693, %v1141
        %v1206 = vmul.f32 %v694, %v1142
        %v1207 = vmul.f32 %v695, %v1143
        %v1208 = vmul.f32 %v696, %v1144
        %v1209 = vmul.f32 %v697, %v1145
        %v1210 = vmul.f32 %v698, %v1146
        %v1211 = vmul.f32 %v699, %v1147
        %v1212 = vmul.f32 %v700, %v1148
        %v1213 = vmul.f32 %v701, %v1149
        %v1214 = vmul.f32 %v702, %v1150
        %v1215 = vmul.f32 %v703, %v1151
        %v1216 = vmul.f32 %v704, %v1152
        %v1217 = vmul.f32 %v705, %v1153
        %v1218 = vmul.f32 %v706, %v1154
        %v1219 = vmul.f32 %v707, %v1155
        %v1220 = vmul.f32 %v708, %v1156
        %v1221 = vmul.f32 %v709, %v1157
        %v1222 = vmul.f32 %v710, %v1158
        %v1223 = vmul.f32 %v711, %v1159
        %v1224 = vmul.f32 %v712, %v1160
        %v1225 = vmul.f32 %v713, %v1161
        %v1226 = vmul.f32 %v714, %v1162
        %v1227 = vmul.f32 %v715, %v1163
        %v1228 = vmul.f32 %v716, %v1164
        %v1229 = vmul.f32 %v717, %v1165
        %v1230 = vmul.f32 %v718, %v1166
        %v1231 = vmul.f32 %v719, %v1167
        %v1232 = vmul.f32 %v720, %v1168
        %v1233 = vmul.f32 %v721, %v1169
        %v1234 = vmul.f32 %v722, %v1170
        %v1235 = vmul.f32 %v723, %v1171
        %v1236 = vmul.f32 %v724, %v1172
        %v1237 = vmul.f32 %v725, %v1173
        %v1238 = vmul.f32 %v726, %v1174
        %v1239 = vmul.f32 %v727, %v1175
        %v1240 = vmul.f32 %v728, %v1176
        %v1241 = vpack.c.bf16 %v1179, %v1177
        %v1242 = vpack.c.bf16 %v1180, %v1178
        %v1243 = vpack.c.bf16 %v1183, %v1181
        %v1244 = vpack.c.bf16 %v1184, %v1182
        %v1245 = vpack.c.bf16 %v1187, %v1185
        %v1246 = vpack.c.bf16 %v1188, %v1186
        %v1247 = vpack.c.bf16 %v1191, %v1189
        %v1248 = vpack.c.bf16 %v1192, %v1190
        %v1249 = vpack.c.bf16 %v1195, %v1193
        %v1250 = vpack.c.bf16 %v1196, %v1194
        %v1251 = vpack.c.bf16 %v1199, %v1197
        %v1252 = vpack.c.bf16 %v1200, %v1198
        %v1253 = vpack.c.bf16 %v1203, %v1201
        %v1254 = vpack.c.bf16 %v1204, %v1202
        %v1255 = vpack.c.bf16 %v1207, %v1205
        %v1256 = vpack.c.bf16 %v1208, %v1206
        %v1257 = vpack.c.bf16 %v1211, %v1209
        %v1258 = vpack.c.bf16 %v1212, %v1210
        %v1259 = vpack.c.bf16 %v1215, %v1213
        %v1260 = vpack.c.bf16 %v1216, %v1214
        %v1261 = vpack.c.bf16 %v1219, %v1217
        %v1262 = vpack.c.bf16 %v1220, %v1218
        %v1263 = vpack.c.bf16 %v1223, %v1221
        %v1264 = vpack.c.bf16 %v1224, %v1222
        %v1265 = vpack.c.bf16 %v1227, %v1225
        %v1266 = vpack.c.bf16 %v1228, %v1226
        %v1267 = vpack.c.bf16 %v1231, %v1229
        %v1268 = vpack.c.bf16 %v1232, %v1230
        %v1269 = vpack.c.bf16 %v1235, %v1233
        %v1270 = vpack.c.bf16 %v1236, %v1234
        %v1271 = vpack.c.bf16 %v1239, %v1237
        %v1272 = vpack.c.bf16 %v1240, %v1238
        %v1273 = vld [vmem:[%s3] sm:$0xf]
        %v1274 = vld [vmem:[%s3 + $0x4] sm:$0xf]
        %v1275 = vld [vmem:[%s3 + $0x8] sm:$0xf]
        %v1276 = vld [vmem:[%s3 + $0xc] sm:$0xf]
        %v1277 = vld [vmem:[%s3 + $0x10] sm:$0xf]
        %v1278 = vld [vmem:[%s3 + $0x14] sm:$0xf]
        %v1279 = vld [vmem:[%s3 + $0x18] sm:$0xf]
        %v1280 = vld [vmem:[%s3 + $0x1c] sm:$0xf]
        %v1281 = vld [vmem:[%s3 + $0x20] sm:$0xf]
        %v1282 = vld [vmem:[%s3 + $0x24] sm:$0xf]
        %v1283 = vld [vmem:[%s3 + $0x28] sm:$0xf]
        %v1284 = vld [vmem:[%s3 + $0x2c] sm:$0xf]
        %v1285 = vld [vmem:[%s3 + $0x30] sm:$0xf]
        %v1286 = vld [vmem:[%s3 + $0x34] sm:$0xf]
        %v1287 = vld [vmem:[%s3 + $0x38] sm:$0xf]
        %v1288 = vld [vmem:[%s3 + $0x3c] sm:$0xf]
        %v1289 = vld [vmem:[%s3 + $0x40] sm:$0xf]
        %v1290 = vld [vmem:[%s3 + $0x44] sm:$0xf]
        %v1291 = vld [vmem:[%s3 + $0x48] sm:$0xf]
        %v1292 = vld [vmem:[%s3 + $0x4c] sm:$0xf]
        %v1293 = vld [vmem:[%s3 + $0x50] sm:$0xf]
        %v1294 = vld [vmem:[%s3 + $0x54] sm:$0xf]
        %v1295 = vld [vmem:[%s3 + $0x58] sm:$0xf]
        %v1296 = vld [vmem:[%s3 + $0x5c] sm:$0xf]
        %v1297 = vld [vmem:[%s3 + $0x60] sm:$0xf]
        %v1298 = vld [vmem:[%s3 + $0x64] sm:$0xf]
        %v1299 = vld [vmem:[%s3 + $0x68] sm:$0xf]
        %v1300 = vld [vmem:[%s3 + $0x6c] sm:$0xf]
        %v1301 = vld [vmem:[%s3 + $0x70] sm:$0xf]
        %v1302 = vld [vmem:[%s3 + $0x74] sm:$0xf]
        %v1303 = vld [vmem:[%s3 + $0x78] sm:$0xf]
        %v1304 = vld [vmem:[%s3 + $0x7c] sm:$0xf]
        %v1305 = vld [vmem:[%s4] sm:$0x1]
        %v1306 = vunpack.c.l.bf16 %v1305
        %v1307 = vlaneseq
        %v1308 = vshrl.u32 %v1307, 7
        %v1309 = vsub.s32 0, %v1308
        %v1310 = vrot.slane %v1306, %v1309
        %v1343 = vunpack.c.l.b16 %v1273
        %v1344 = vunpack.c.l.b16 %v1274
        %v1345 = vunpack.c.l.b16 %v1275
        %v1346 = vunpack.c.l.b16 %v1276
        %v1347 = vunpack.c.l.b16 %v1277
        %v1348 = vunpack.c.l.b16 %v1278
        %v1349 = vunpack.c.l.b16 %v1279
        %v1350 = vunpack.c.l.b16 %v1280
        %v1351 = vunpack.c.l.b16 %v1281
        %v1352 = vunpack.c.l.b16 %v1282
        %v1353 = vunpack.c.l.b16 %v1283
        %v1354 = vunpack.c.l.b16 %v1284
        %v1355 = vunpack.c.l.b16 %v1285
        %v1356 = vunpack.c.l.b16 %v1286
        %v1357 = vunpack.c.l.b16 %v1287
        %v1358 = vunpack.c.l.b16 %v1288
        %v1359 = vunpack.c.l.b16 %v1289
        %v1360 = vunpack.c.l.b16 %v1290
        %v1361 = vunpack.c.l.b16 %v1291
        %v1362 = vunpack.c.l.b16 %v1292
        %v1363 = vunpack.c.l.b16 %v1293
        %v1364 = vunpack.c.l.b16 %v1294
        %v1365 = vunpack.c.l.b16 %v1295
        %v1366 = vunpack.c.l.b16 %v1296
        %v1367 = vunpack.c.l.b16 %v1297
        %v1368 = vunpack.c.l.b16 %v1298
        %v1369 = vunpack.c.l.b16 %v1299
        %v1370 = vunpack.c.l.b16 %v1300
        %v1371 = vunpack.c.l.b16 %v1301
        %v1372 = vunpack.c.l.b16 %v1302
        %v1373 = vunpack.c.l.b16 %v1303
        %v1374 = vunpack.c.l.b16 %v1304
        %v1375 = vpack.c.b16 %v1344, %v1343
        %v1376 = vpack.c.b16 %v1346, %v1345
        %v1377 = vpack.c.b16 %v1348, %v1347
        %v1378 = vpack.c.b16 %v1350, %v1349
        %v1379 = vpack.c.b16 %v1352, %v1351
        %v1380 = vpack.c.b16 %v1354, %v1353
        %v1381 = vpack.c.b16 %v1356, %v1355
        %v1382 = vpack.c.b16 %v1358, %v1357
        %v1383 = vpack.c.b16 %v1360, %v1359
        %v1384 = vpack.c.b16 %v1362, %v1361
        %v1385 = vpack.c.b16 %v1364, %v1363
        %v1386 = vpack.c.b16 %v1366, %v1365
        %v1387 = vpack.c.b16 %v1368, %v1367
        %v1388 = vpack.c.b16 %v1370, %v1369
        %v1389 = vpack.c.b16 %v1372, %v1371
        %v1390 = vpack.c.b16 %v1374, %v1373
        %1407 = vmatprep.subr.bf16.mxu0 0
        %1408 = vmatpush1.bf16.msra.mxu0 %v1375
        %1409 = vmatprep.subr.bf16.mxu0 0
        %1410 = vmatpush1.bf16.msra.mxu0 %v1376
        %1411 = vmatprep.subr.bf16.mxu0 0
        %1412 = vmatpush1.bf16.msra.mxu0 %v1377
        %1413 = vmatprep.subr.bf16.mxu0 0
        %1414 = vmatpush1.bf16.msra.mxu0 %v1378
        %1415 = vmatprep.subr.bf16.mxu0 0
        %1416 = vmatpush1.bf16.msra.mxu0 %v1379
        %1417 = vmatprep.subr.bf16.mxu0 0
        %1418 = vmatpush1.bf16.msra.mxu0 %v1380
        %1419 = vmatprep.subr.bf16.mxu0 0
        %1420 = vmatpush1.bf16.msra.mxu0 %v1381
        %1421 = vmatprep.subr.bf16.mxu0 0
        %1422 = vmatpush1.bf16.msra.mxu0 %v1382
        %1423 = vmatprep.subr.bf16.mxu0 0
        %1424 = vmatpush1.bf16.msra.mxu0 %v1383
        %1425 = vmatprep.subr.bf16.mxu0 0
        %1426 = vmatpush1.bf16.msra.mxu0 %v1384
        %1427 = vmatprep.subr.bf16.mxu0 0
        %1428 = vmatpush1.bf16.msra.mxu0 %v1385
        %1429 = vmatprep.subr.bf16.mxu0 0
        %1430 = vmatpush1.bf16.msra.mxu0 %v1386
        %1431 = vmatprep.subr.bf16.mxu0 0
        %1432 = vmatpush1.bf16.msra.mxu0 %v1387
        %1433 = vmatprep.subr.bf16.mxu0 0
        %1434 = vmatpush1.bf16.msra.mxu0 %v1388
        %1435 = vmatprep.subr.bf16.mxu0 0
        %1436 = vmatpush1.bf16.msra.mxu0 %v1389
        %1437 = vmatprep.subr.bf16.mxu0 0
        %1438 = vmatpush1.bf16.msra.mxu0 %v1390
        %1439 = vmatprep.mubr.bf16.mxu0 %v1242
        %1440 = vmatmul.mubr.bf16.gmra.mrb[0].mxu0 %v1241
        %v1441 = vpop.f32.mrb[0].mxu0
        %v1442 = vadd.f32 %v1310, %v1441
        %v1443 = vpop.f32.mrb[0].mxu0
        %v1444 = vpop.f32.mrb[0].mxu0
        %v1445 = vadd.f32 %v1310, %v1444
        %v1446 = vpop.f32.mrb[0].mxu0
        %1447 = vmatprep.mubr.bf16.mxu0 %v1244
        %1448 = vmatmul.mubr.bf16.gmra.mrb[0].mxu0 %v1243
        %v1449 = vpop.f32.mrb[0].mxu0
        %v1450 = vadd.f32 %v1310, %v1449
        %v1451 = vpop.f32.mrb[0].mxu0
        %v1452 = vpop.f32.mrb[0].mxu0
        %v1453 = vadd.f32 %v1310, %v1452
        %v1454 = vpop.f32.mrb[0].mxu0
        %1455 = vmatprep.mubr.bf16.mxu0 %v1246
        %1456 = vmatmul.mubr.bf16.gmra.mrb[0].mxu0 %v1245
        %v1457 = vpop.f32.mrb[0].mxu0
        %v1458 = vadd.f32 %v1310, %v1457
        %v1459 = vpop.f32.mrb[0].mxu0
        %v1460 = vpop.f32.mrb[0].mxu0
        %v1461 = vadd.f32 %v1310, %v1460
        %v1462 = vpop.f32.mrb[0].mxu0
        %1463 = vmatprep.mubr.bf16.mxu0 %v1248
        %1464 = vmatmul.mubr.bf16.gmra.mrb[0].mxu0 %v1247
        %v1465 = vpop.f32.mrb[0].mxu0
        %v1466 = vadd.f32 %v1310, %v1465
        %v1467 = vpop.f32.mrb[0].mxu0
        %v1468 = vpop.f32.mrb[0].mxu0
        %v1469 = vadd.f32 %v1310, %v1468
        %v1470 = vpop.f32.mrb[0].mxu0
        %1471 = vmatprep.mubr.bf16.mxu0 %v1250
        %1472 = vmatmul.mubr.bf16.gmra.mrb[0].mxu0 %v1249
        %v1473 = vpop.f32.mrb[0].mxu0
        %v1474 = vadd.f32 %v1310, %v1473
        %v1475 = vpop.f32.mrb[0].mxu0
        %v1476 = vpop.f32.mrb[0].mxu0
        %v1477 = vadd.f32 %v1310, %v1476
        %v1478 = vpop.f32.mrb[0].mxu0
        %1479 = vmatprep.mubr.bf16.mxu0 %v1252
        %1480 = vmatmul.mubr.bf16.gmra.mrb[0].mxu0 %v1251
        %v1481 = vpop.f32.mrb[0].mxu0
        %v1482 = vadd.f32 %v1310, %v1481
        %v1483 = vpop.f32.mrb[0].mxu0
        %v1484 = vpop.f32.mrb[0].mxu0
        %v1485 = vadd.f32 %v1310, %v1484
        %v1486 = vpop.f32.mrb[0].mxu0
        %1487 = vmatprep.mubr.bf16.mxu0 %v1254
        %1488 = vmatmul.mubr.bf16.gmra.mrb[0].mxu0 %v1253
        %v1489 = vpop.f32.mrb[0].mxu0
        %v1490 = vadd.f32 %v1310, %v1489
        %v1491 = vpop.f32.mrb[0].mxu0
        %v1492 = vpop.f32.mrb[0].mxu0
        %v1493 = vadd.f32 %v1310, %v1492
        %v1494 = vpop.f32.mrb[0].mxu0
        %1495 = vmatprep.mubr.bf16.mxu0 %v1256
        %1496 = vmatmul.mubr.bf16.gmra.mrb[0].mxu0 %v1255
        %v1497 = vpop.f32.mrb[0].mxu0
        %v1498 = vadd.f32 %v1310, %v1497
        %v1499 = vpop.f32.mrb[0].mxu0
        %v1500 = vpop.f32.mrb[0].mxu0
        %v1501 = vadd.f32 %v1310, %v1500
        %v1502 = vpop.f32.mrb[0].mxu0
        %1503 = vmatprep.mubr.bf16.mxu0 %v1258
        %1504 = vmatmul.mubr.bf16.gmra.mrb[0].mxu0 %v1257
        %v1505 = vpop.f32.mrb[0].mxu0
        %v1506 = vadd.f32 %v1310, %v1505
        %v1507 = vpop.f32.mrb[0].mxu0
        %v1508 = vpop.f32.mrb[0].mxu0
        %v1509 = vadd.f32 %v1310, %v1508
        %v1510 = vpop.f32.mrb[0].mxu0
        %1511 = vmatprep.mubr.bf16.mxu0 %v1260
        %1512 = vmatmul.mubr.bf16.gmra.mrb[0].mxu0 %v1259
        %v1513 = vpop.f32.mrb[0].mxu0
        %v1514 = vadd.f32 %v1310, %v1513
        %v1515 = vpop.f32.mrb[0].mxu0
        %v1516 = vpop.f32.mrb[0].mxu0
        %v1517 = vadd.f32 %v1310, %v1516
        %v1518 = vpop.f32.mrb[0].mxu0
        %1519 = vmatprep.mubr.bf16.mxu0 %v1262
        %1520 = vmatmul.mubr.bf16.gmra.mrb[0].mxu0 %v1261
        %v1521 = vpop.f32.mrb[0].mxu0
        %v1522 = vadd.f32 %v1310, %v1521
        %v1523 = vpop.f32.mrb[0].mxu0
        %v1524 = vpop.f32.mrb[0].mxu0
        %v1525 = vadd.f32 %v1310, %v1524
        %v1526 = vpop.f32.mrb[0].mxu0
        %1527 = vmatprep.mubr.bf16.mxu0 %v1264
        %1528 = vmatmul.mubr.bf16.gmra.mrb[0].mxu0 %v1263
        %v1529 = vpop.f32.mrb[0].mxu0
        %v1530 = vadd.f32 %v1310, %v1529
        %v1531 = vpop.f32.mrb[0].mxu0
        %v1532 = vpop.f32.mrb[0].mxu0
        %v1533 = vadd.f32 %v1310, %v1532
        %v1534 = vpop.f32.mrb[0].mxu0
        %1535 = vmatprep.mubr.bf16.mxu0 %v1266
        %1536 = vmatmul.mubr.bf16.gmra.mrb[0].mxu0 %v1265
        %v1537 = vpop.f32.mrb[0].mxu0
        %v1538 = vadd.f32 %v1310, %v1537
        %v1539 = vpop.f32.mrb[0].mxu0
        %v1540 = vpop.f32.mrb[0].mxu0
        %v1541 = vadd.f32 %v1310, %v1540
        %v1542 = vpop.f32.mrb[0].mxu0
        %1543 = vmatprep.mubr.bf16.mxu0 %v1268
        %1544 = vmatmul.mubr.bf16.gmra.mrb[0].mxu0 %v1267
        %v1545 = vpop.f32.mrb[0].mxu0
        %v1546 = vadd.f32 %v1310, %v1545
        %v1547 = vpop.f32.mrb[0].mxu0
        %v1548 = vpop.f32.mrb[0].mxu0
        %v1549 = vadd.f32 %v1310, %v1548
        %v1550 = vpop.f32.mrb[0].mxu0
        %1551 = vmatprep.mubr.bf16.mxu0 %v1270
        %1552 = vmatmul.mubr.bf16.gmra.mrb[0].mxu0 %v1269
        %v1553 = vpop.f32.mrb[0].mxu0
        %v1554 = vadd.f32 %v1310, %v1553
        %v1555 = vpop.f32.mrb[0].mxu0
        %v1556 = vpop.f32.mrb[0].mxu0
        %v1557 = vadd.f32 %v1310, %v1556
        %v1558 = vpop.f32.mrb[0].mxu0
        %1559 = vmatprep.mubr.bf16.mxu0 %v1272
        %1560 = vmatmul.mubr.bf16.gmra.mrb[0].mxu0 %v1271
        %v1561 = vpop.f32.mrb[0].mxu0
        %v1562 = vadd.f32 %v1310, %v1561
        %v1563 = vpop.f32.mrb[0].mxu0
        %v1564 = vpop.f32.mrb[0].mxu0
        %v1565 = vadd.f32 %v1310, %v1564
        %v1566 = vpop.f32.mrb[0].mxu0
        %1567 = vdwg.mxu0
        %1568 = vst [vmem:[%s218] sm:$0xff] %v1442
        %1569 = vst [vmem:[%s218 + $0x8] sm:$0xff] %v1445
        %1570 = vst [vmem:[%s218 + $0x10] sm:$0xff] %v1450
        %1571 = vst [vmem:[%s218 + $0x18] sm:$0xff] %v1453
        %1572 = vst [vmem:[%s218 + $0x20] sm:$0xff] %v1458
        %1573 = vst [vmem:[%s218 + $0x28] sm:$0xff] %v1461
        %1574 = vst [vmem:[%s218 + $0x30] sm:$0xff] %v1466
        %1575 = vst [vmem:[%s218 + $0x38] sm:$0xff] %v1469
        %1576 = vst [vmem:[%s218 + $0x40] sm:$0xff] %v1474
        %1577 = vst [vmem:[%s218 + $0x48] sm:$0xff] %v1477
        %1578 = vst [vmem:[%s218 + $0x50] sm:$0xff] %v1482
        %1579 = vst [vmem:[%s218 + $0x58] sm:$0xff] %v1485
        %1580 = vst [vmem:[%s218 + $0x60] sm:$0xff] %v1490
        %1581 = vst [vmem:[%s218 + $0x68] sm:$0xff] %v1493
        %1582 = vst [vmem:[%s218 + $0x70] sm:$0xff] %v1498
        %1583 = vst [vmem:[%s218 + $0x78] sm:$0xff] %v1501
        %1584 = vst [vmem:[%s218 + $0x80] sm:$0xff] %v1506
        %1585 = vst [vmem:[%s218 + $0x88] sm:$0xff] %v1509
        %1586 = vst [vmem:[%s218 + $0x90] sm:$0xff] %v1514
        %1587 = vst [vmem:[%s218 + $0x98] sm:$0xff] %v1517
        %1588 = vst [vmem:[%s218 + $0xa0] sm:$0xff] %v1522
        %1589 = vst [vmem:[%s218 + $0xa8] sm:$0xff] %v1525
        %1590 = vst [vmem:[%s218 + $0xb0] sm:$0xff] %v1530
        %1591 = vst [vmem:[%s218 + $0xb8] sm:$0xff] %v1533
        %1592 = vst [vmem:[%s218 + $0xc0] sm:$0xff] %v1538
        %1593 = vst [vmem:[%s218 + $0xc8] sm:$0xff] %v1541
        %1594 = vst [vmem:[%s218 + $0xd0] sm:$0xff] %v1546
        %1595 = vst [vmem:[%s218 + $0xd8] sm:$0xff] %v1549
        %1596 = vst [vmem:[%s218 + $0xe0] sm:$0xff] %v1554
        %1597 = vst [vmem:[%s218 + $0xe8] sm:$0xff] %v1557
        %1598 = vst [vmem:[%s218 + $0xf0] sm:$0xff] %v1562
        %1599 = vst [vmem:[%s218 + $0xf8] sm:$0xff] %v1565
        %s1600 = sand.u32 %s137, 1
        %s1601 = scalar_lea.sflag [#allocation3], %s1600
        %s1602 = sand.u32 %s137, 1
        %s1603 = smul.addr %s1602, 256
        %s1604 = scalar_lea.vmem [#allocation2], %s1603
        // Predicated region
        $region41: #{ffn_forward.1} parent=39 // pred_check
          %p1605 = pneg %p147
        $region42: #{ffn_forward.1} parent=39 // pred_check_branch
          %1607 = sbr.rel (%p1605) target = $region44
        $region43: #{ffn_forward.1} parent=39 // pred_region
          %s1608 = smul.u32 32, %s19
          %s1610 = ssub.s32 4096, 4096
          %1611 = vsyncadd %s1601, %s1610
          %s1612 = smul.addr %s1608, 128
          %s1613 = scalar_lea.hbm %s5, %s1612
          %s1614 = sshll.u32 %s1604, 4
          %s1615 = int_to_ptr.vmem [resolvable:$true] %s1614
          %1620 = dma.vmem_to_hbm [thread:$0]  %s1615, 4096, %s1613, %s1601, 128, 128, 8
        $region44: #{ffn_forward.1} parent=39 // pred_fallthru
          _
      $region40: #{ffn_forward.1} parent=5 // pred_fallthru
        _
      %p1621 = scmp.le.s32.totalorder 2, %s14
      // Predicated region
      $region45: #{ffn_forward.1} parent=5 // pred_check
        %p1622 = pneg %p1621
      $region46: #{ffn_forward.1} parent=5 // pred_check_branch
        %1624 = sbr.rel (%p1622) target = $region48
      $region47: #{ffn_forward.1} parent=5 // pred_region
        %s1625 = ssub.s32 %s14, 2
        // Predicated region
        $region49: #{ffn_forward.1} parent=47 // pred_check
          %p1626 = pneg %p153
        $region50: #{ffn_forward.1} parent=47 // pred_check_branch
          %1628 = sbr.rel (%p1626) target = $region52
        $region51: #{ffn_forward.1} parent=47 // pred_region
          %s1629 = sand.u32 %s138, 1
          %s1630 = scalar_lea.sflag [#allocation3], %s1629
          %s1631 = sand.u32 %s138, 1
          %s1632 = smul.addr %s1631, 256
          %s1633 = scalar_lea.vmem [#allocation2], %s1632
          %1634 = dma.done %s1630, 4096
        $region52: #{ffn_forward.1} parent=47 // pred_fallthru
          _
      $region48: #{ffn_forward.1} parent=5 // pred_fallthru
        _
    $region6: #{ffn_forward.1} parent=1 // loop_footer
      %s18 = sadd.s32 1, %s14
    $region7: #{ffn_forward.1} parent=1 // loop_footer_branch
      %13 = sbr.rel target = $region3
    $region8: #{ffn_forward.1} parent=1 // loop_exit
      _
    %1635 = vsyncpa [#allocation3], 1
    %s1636 = scalar_lea.sflag [#allocation3], 1
    %1637 = vsyncpa %s1636, 1

</llo_original>
